<compile_context>
chip_gen: v7x
topology: tpu7x:2x2x1
jax: 0.10.0
libtpu: 0.0.40
codegen_flags: <defaults>
</compile_context>

<pallas_src>
import jax
import jax.numpy as jnp
import numpy as np
from jax.experimental import pallas as pl
from jax.experimental.pallas import tpu as pltpu


# ----------------------------- model config ---------------------------------
COND_CHANNELS = 4          # cond_channels
CONV_IN = 4                # conv_in_channels
CONV_OUT = 4               # conv_out_channels
CONV_LAYERS = 3            # conv_layers
CONV_KSIZE = 3             # conv_kernel_size
HIDDEN = 32                # kpnet_hidden_channels (small test size)
N_RES = 5                  # number of residual blocks
NEG_SLOPE = 0.1            # LeakyReLU negative_slope
# kpnet_conv_size = 1 (default) -> all post-input convs are pointwise (1x1).
# kpnet_dropout = 0.0 -> dropout is identity.

K_CH = CONV_IN * CONV_OUT * CONV_KSIZE * CONV_LAYERS   # 144 (multiple of 8/16)
B_CH = CONV_OUT * CONV_LAYERS                          # 12
IM2COL_CH = 5 * COND_CHANNELS                          # 20

T_TILE_CAP = 4096   # double-buffered bf16 outputs at cap: ~2.8 MB


def _lrelu(x):
    return jnp.where(x >= 0, x, NEG_SLOPE * x)


def _round_up(x, m):
    return ((x + m - 1) // m) * m


def _pick_time_tile(B, T):
    """Lane-dense time tile (multiple of 128), no divisibility requirement on T.

    The wrapper zero-pads T up to a multiple of the tile, so any sequence
    length runs at the full tile size (the old scheme stranded e.g. T=384/640
    at a 128-lane tile, ~29% of the HBM roofline vs ~85% at 512+).
    """
    T128 = _round_up(max(T, 1), 128)
    t_tile = min(T_TILE_CAP, T128)
    # v7x shards the "parallel" grid axes across its 2 TensorCores; when the
    # batch axis can't provide parallelism, guarantee >= 2 time tiles.
    if B == 1 and T128 > 128 and T128 <= T_TILE_CAP:
        t_tile = _round_up((T128 + 1) // 2, 128)
    T_pad = _round_up(T128, t_tile)
    return t_tile, T_pad


# ------------------------------ Pallas kernel --------------------------------
def _kpnet_kernel(xcol_ref, w_in_ref, b_in_ref, w_res_ref, b_res_ref,
                  w_k_ref, b_k_ref, w_b_ref, b_b_ref, k_out_ref, b_out_ref):
    """One (batch, time-tile) block per grid step.  Time lives on the lane axis.

    xcol_ref : (1, 20, tT)   bf16  im2col'd conditioning (5 taps x 4 channels)
    w_in     : (32, 20)      bf16  input_conv weight (im2col layout)
    b_in     : (32, 1)       f32
    w_res    : (10, 32, 32)  bf16  residual 1x1 weights: [2l]=first, [2l+1]=second
    b_res    : (10, 32, 1)   f32
    w_k/b_k  : (144, 32)/(144, 1)  kernel_conv head
    w_b/b_b  : (12, 32)/(12, 1)    bias_conv head
    k_out    : (1, 144, tT)  bf16
    b_out    : (1, 12, tT)   bf16
    """
    xcol = xcol_ref[0]                                     # (20, tT) bf16

    # input Conv1d(4->32, k=5, pad=2) as a single matmul over the im2col rows.
    h = jnp.dot(w_in_ref[...], xcol, preferred_element_type=jnp.float32)
    h = _lrelu(h + b_in_ref[...])                          # (32, tT) f32

    # 5 residual blocks: Dropout(0) -> Conv1x1 -> LeakyReLU -> Conv1x1, + skip.
    # Elementwise kept in f32 (v5e has no bf16 VPU path); bf16 only as MXU
    # operands with f32 accumulation.
    for l in range(N_RES):
        r = jnp.dot(w_res_ref[2 * l], h.astype(jnp.bfloat16),
                    preferred_element_type=jnp.float32) + b_res_ref[2 * l]
        r = _lrelu(r)
        r = jnp.dot(w_res_ref[2 * l + 1], r.astype(jnp.bfloat16),
                    preferred_element_type=jnp.float32) + b_res_ref[2 * l + 1]
        h = h + r

    hb = h.astype(jnp.bfloat16)
    # Two lane-dense bf16 output streams (kernels + bias): bf16 stores halve
    # the dominant HBM writeback; separate outputs avoid any wrapper-side
    # slice/copy of the big tensor.
    k_out_ref[0] = (jnp.dot(w_k_ref[...], hb, preferred_element_type=jnp.float32)
                    + b_k_ref[...]).astype(jnp.bfloat16)
    b_out_ref[0] = (jnp.dot(w_b_ref[...], hb, preferred_element_type=jnp.float32)
                    + b_b_ref[...]).astype(jnp.bfloat16)


# ------------------------------ wrapper --------------------------------------
@jax.jit
def kernel_predictor_forward(c, params):
    """c: (batch, cond_channels, cond_length) — torch NCL layout."""
    B, Ccond, T = c.shape
    assert Ccond == COND_CHANNELS

    t_tile, T_pad = _pick_time_tile(B, T)
    n_t = T_pad // t_tile

    # im2col in the wrapper: halo pad (2,2) for the 5-tap conv plus zero-pad up
    # to T_pad; stack the 5 shifted views -> (B, 20, T_pad) in bf16.
    x = c.astype(jnp.float32)
    x_pad = jnp.pad(x, ((0, 0), (0, 0), (2, T_pad - T + 2)))
    xcol = jnp.stack([x_pad[:, :, k:k + T_pad] for k in range(5)], axis=1)
    xcol = xcol.reshape(B, IM2COL_CH, T_pad).astype(jnp.bfloat16)

    # Repack weights for the (C, T) kernel layout (once per call, tiny).
    # w_in (H, Cin, 5) -> (H, 5*Cin) with row order (tap, channel) = xcol rows.
    w_in = jnp.transpose(params["w_in"], (0, 2, 1)).reshape(
        HIDDEN, IM2COL_CH).astype(jnp.bfloat16)
    b_in = params["b_in"].reshape(HIDDEN, 1).astype(jnp.float32)
    w_res = jnp.stack([params["w_res_a"], params["w_res_b"]], axis=1).reshape(
        2 * N_RES, HIDDEN, HIDDEN).astype(jnp.bfloat16)
    b_res = jnp.stack([params["b_res_a"], params["b_res_b"]], axis=1).reshape(
        2 * N_RES, HIDDEN, 1).astype(jnp.float32)
    w_k = params["w_k"].astype(jnp.bfloat16)                       # (144, 32)
    b_k = params["b_k"].reshape(K_CH, 1).astype(jnp.float32)
    w_b = params["w_b"].astype(jnp.bfloat16)                       # (12, 32)
    b_b = params["b_b"].reshape(B_CH, 1).astype(jnp.float32)

    in_specs = [
        pl.BlockSpec((1, IM2COL_CH, t_tile), lambda b, t: (b, 0, t)),       # xcol
        pl.BlockSpec((HIDDEN, IM2COL_CH), lambda b, t: (0, 0)),             # w_in
        pl.BlockSpec((HIDDEN, 1), lambda b, t: (0, 0)),                     # b_in
        pl.BlockSpec((2 * N_RES, HIDDEN, HIDDEN), lambda b, t: (0, 0, 0)),  # w_res
        pl.BlockSpec((2 * N_RES, HIDDEN, 1), lambda b, t: (0, 0, 0)),       # b_res
        pl.BlockSpec((K_CH, HIDDEN), lambda b, t: (0, 0)),                  # w_k
        pl.BlockSpec((K_CH, 1), lambda b, t: (0, 0)),                       # b_k
        pl.BlockSpec((B_CH, HIDDEN), lambda b, t: (0, 0)),                  # w_b
        pl.BlockSpec((B_CH, 1), lambda b, t: (0, 0)),                       # b_b
    ]
    out_specs = [
        pl.BlockSpec((1, K_CH, t_tile), lambda b, t: (b, 0, t)),
        pl.BlockSpec((1, B_CH, t_tile), lambda b, t: (b, 0, t)),
    ]
    out_shape = (
        jax.ShapeDtypeStruct((B, K_CH, T_pad), jnp.bfloat16),
        jax.ShapeDtypeStruct((B, B_CH, T_pad), jnp.bfloat16),
    )

    k_full, b_full = pl.pallas_call(
        _kpnet_kernel,
        out_shape=out_shape,
        grid_spec=pltpu.PrefetchScalarGridSpec(
            num_scalar_prefetch=0,
            grid=(B, n_t),
            in_specs=in_specs,
            out_specs=out_specs,
        ),
        compiler_params=pltpu.CompilerParams(
            # Every (b, t) block writes a disjoint output tile -> both parallel.
            dimension_semantics=("parallel", "parallel"),
            # Headroom for 4096-lane tiles on all generations (<= physical VMEM
            # of v5e/v6e/v7x; usage at cap is ~9 MB).
            vmem_limit_bytes=32 * 1024 * 1024,
        ),
    )(xcol, w_in, b_in, w_res, b_res, w_k, b_k, w_b, b_b)

    # Columns T..T_pad were computed from zero-padding (garbage) -> slice them
    # off; this is a no-op when T is already a multiple of the tile.  Reshapes
    # below are metadata-only (torch .view() semantics, no transposes).
    k = k_full[:, :, :T]                                   # (B, 144, T) bf16
    b = b_full[:, :, :T]                                   # (B, 12, T)  bf16
    kernels = k.reshape(B, CONV_LAYERS, CONV_IN, CONV_OUT, CONV_KSIZE, T)
    bias = b.reshape(B, CONV_LAYERS, CONV_OUT, T)
    return kernels, bias


# --------------------------- pure-JAX reference -------------------------------
def _reference_forward(c, p):
    """Same math as the torch module, mirroring the kernel's bf16-operand /
    f32-accumulation numerics (final outputs kept in f32)."""
    B, Ccond, T = c.shape
    bf = jnp.bfloat16
    x = c.astype(jnp.float32)
    xp = jnp.pad(x, ((0, 0), (0, 0), (2, 2)))
    xcol = jnp.stack([xp[:, :, k:k + T] for k in range(5)], axis=1).reshape(
        B, IM2COL_CH, T)
    w_in2 = jnp.transpose(p["w_in"], (0, 2, 1)).reshape(HIDDEN, IM2COL_CH)
    h = jnp.einsum("hc,bct->bht", w_in2.astype(bf), xcol.astype(bf),
                   preferred_element_type=jnp.float32)
    h = _lrelu(h + p["b_in"][None, :, None])
    for l in range(N_RES):
        r = jnp.einsum("oh,bht->bot", p["w_res_a"][l].astype(bf), h.astype(bf),
                       preferred_element_type=jnp.float32)
        r = _lrelu(r + p["b_res_a"][l][None, :, None])
        r = jnp.einsum("oh,bht->bot", p["w_res_b"][l].astype(bf), r.astype(bf),
                       preferred_element_type=jnp.float32)
        r = r + p["b_res_b"][l][None, :, None]
        h = h + r
    ko = jnp.einsum("oh,bht->bot", p["w_k"].astype(bf), h.astype(bf),
                    preferred_element_type=jnp.float32) + p["b_k"][None, :, None]
    bo = jnp.einsum("oh,bht->bot", p["w_b"].astype(bf), h.astype(bf),
                    preferred_element_type=jnp.float32) + p["b_b"][None, :, None]
    kernels = ko.reshape(B, CONV_LAYERS, CONV_IN, CONV_OUT, CONV_KSIZE, T)
    bias = bo.reshape(B, CONV_LAYERS, CONV_OUT, T)
    return kernels, bias


# ------------------------------- main -----------------------------------------
def _init_params(key):
    ks = jax.random.split(key, 10)
    s = 0.1
    return {
        "w_in": s * jax.random.normal(ks[0], (HIDDEN, COND_CHANNELS, 5), jnp.float32),
        "b_in": s * jax.random.normal(ks[1], (HIDDEN,), jnp.float32),
        "w_res_a": s * jax.random.normal(ks[2], (N_RES, HIDDEN, HIDDEN), jnp.float32),
        "b_res_a": s * jax.random.normal(ks[3], (N_RES, HIDDEN), jnp.float32),
        "w_res_b": s * jax.random.normal(ks[4], (N_RES, HIDDEN, HIDDEN), jnp.float32),
        "b_res_b": s * jax.random.normal(ks[5], (N_RES, HIDDEN), jnp.float32),
        "w_k": s * jax.random.normal(ks[6], (K_CH, HIDDEN), jnp.float32),
        "b_k": s * jax.random.normal(ks[7], (K_CH,), jnp.float32),
        "w_b": s * jax.random.normal(ks[8], (B_CH, HIDDEN), jnp.float32),
        "b_b": s * jax.random.normal(ks[9], (B_CH,), jnp.float32),
    }


if __name__ == "__main__":
    key = jax.random.PRNGKey(0)
    pkey, ckey = jax.random.split(key)
    params = _init_params(pkey)

    batch, cond_length = 2, 16
    c = jax.random.normal(ckey, (batch, COND_CHANNELS, cond_length), jnp.float32)

    kernels, bias = kernel_predictor_forward(c, params)
    kernels, bias = jax.block_until_ready((kernels, bias))

    assert kernels.shape == (batch, CONV_LAYERS, CONV_IN, CONV_OUT, CONV_KSIZE, cond_length)
    assert bias.shape == (batch, CONV_LAYERS, CONV_OUT, cond_length)

    ref_k, ref_b = _reference_forward(c, params)
    # Kernel outputs are bf16 (perf: halves the dominant output HBM traffic);
    # compare upcast against the f32 bf16-mirrored reference.
    np.testing.assert_allclose(np.asarray(kernels.astype(jnp.float32)),
                               np.asarray(ref_k), rtol=2e-2, atol=2e-2)
    np.testing.assert_allclose(np.asarray(bias.astype(jnp.float32)),
                               np.asarray(ref_b), rtol=2e-2, atol=2e-2)

    print("KERNEL_OK")
</pallas_src>

<mosaic_0001>
module attributes {stable_mosaic.version = 11 : i64} {
  func.func @_kpnet_kernel(%arg0: i32, %arg1: i32, %arg2: memref<1x20x128xbf16, #tpu.memory_space<vmem>>, %arg3: memref<32x20xbf16, #tpu.memory_space<vmem>>, %arg4: memref<32x1xf32, #tpu.memory_space<vmem>>, %arg5: memref<10x32x32xbf16, #tpu.memory_space<vmem>>, %arg6: memref<10x32x1xf32, #tpu.memory_space<vmem>>, %arg7: memref<144x32xbf16, #tpu.memory_space<vmem>>, %arg8: memref<144x1xf32, #tpu.memory_space<vmem>>, %arg9: memref<12x32xbf16, #tpu.memory_space<vmem>>, %arg10: memref<12x1xf32, #tpu.memory_space<vmem>>, %arg11: memref<1x144x128xbf16, #tpu.memory_space<vmem>>, %arg12: memref<1x12x128xbf16, #tpu.memory_space<vmem>>) attributes {dimension_semantics = [#tpu.dimension_semantics<parallel>, #tpu.dimension_semantics<parallel>], iteration_bounds = array<i64: 2, 1>, scalar_prefetch = 0 : i64, scratch_operands = 0 : i64, tpu.core_type = #tpu.core_type<tc>, window_params = [{transform_indices = @transform_0, window_bounds = array<i64: 1, 20, 128>}, {pipeline_mode = #tpu.pipeline_mode<synchronous>, transform_indices = @transform_1, window_bounds = array<i64: 32, 20>}, {pipeline_mode = #tpu.pipeline_mode<synchronous>, transform_indices = @transform_2, window_bounds = array<i64: 32, 1>}, {pipeline_mode = #tpu.pipeline_mode<synchronous>, transform_indices = @transform_3, window_bounds = array<i64: 10, 32, 32>}, {pipeline_mode = #tpu.pipeline_mode<synchronous>, transform_indices = @transform_4, window_bounds = array<i64: 10, 32, 1>}, {pipeline_mode = #tpu.pipeline_mode<synchronous>, transform_indices = @transform_5, window_bounds = array<i64: 144, 32>}, {pipeline_mode = #tpu.pipeline_mode<synchronous>, transform_indices = @transform_6, window_bounds = array<i64: 144, 1>}, {pipeline_mode = #tpu.pipeline_mode<synchronous>, transform_indices = @transform_7, window_bounds = array<i64: 12, 32>}, {pipeline_mode = #tpu.pipeline_mode<synchronous>, transform_indices = @transform_8, window_bounds = array<i64: 12, 1>}, {transform_indices = @transform_9, window_bounds = array<i64: 1, 144, 128>}, {transform_indices = @transform_10, window_bounds = array<i64: 1, 12, 128>}]} {
    %c0 = arith.constant 0 : index
    %c0_0 = arith.constant 0 : index
    %c0_1 = arith.constant 0 : index
    %0 = vector.load %arg2[%c0, %c0_0, %c0_1] : memref<1x20x128xbf16, #tpu.memory_space<vmem>>, vector<1x20x128xbf16>
    %1 = vector.shape_cast %0 : vector<1x20x128xbf16> to vector<20x128xbf16>
    %c0_2 = arith.constant 0 : index
    %c0_3 = arith.constant 0 : index
    %2 = vector.load %arg3[%c0_2, %c0_3] : memref<32x20xbf16, #tpu.memory_space<vmem>>, vector<32x20xbf16>
    %cst = arith.constant dense<0.000000e+00> : vector<32x128xf32>
    %3 = tpu.matmul %2, %1, %cst {dimension_numbers = #tpu.dot_dimension_numbers<[1], [0], [0], [1], [0, 0, 1, 1], [], []>} : vector<32x20xbf16>, vector<20x128xbf16>, vector<32x128xf32> -> vector<32x128xf32>
    %c0_4 = arith.constant 0 : index
    %c0_5 = arith.constant 0 : index
    %4 = vector.load %arg4[%c0_4, %c0_5] : memref<32x1xf32, #tpu.memory_space<vmem>>, vector<32x1xf32>
    %5 = vector.broadcast %4 : vector<32x1xf32> to vector<32x128xf32>
    %6 = arith.addf %3, %5 : vector<32x128xf32>
    %cst_6 = arith.constant 0.000000e+00 : f32
    %7 = vector.broadcast %cst_6 : f32 to vector<32x128xf32>
    %8 = arith.cmpf oge, %6, %7 : vector<32x128xf32>
    %cst_7 = arith.constant 1.000000e-01 : f32
    %9 = vector.broadcast %cst_7 : f32 to vector<32x128xf32>
    %10 = arith.mulf %9, %6 : vector<32x128xf32>
    %11 = arith.select %8, %6, %10 : vector<32x128xi1>, vector<32x128xf32>
    %c0_8 = arith.constant 0 : index
    %c0_9 = arith.constant 0 : index
    %c0_10 = arith.constant 0 : index
    %12 = vector.load %arg5[%c0_8, %c0_9, %c0_10] : memref<10x32x32xbf16, #tpu.memory_space<vmem>>, vector<1x32x32xbf16>
    %13 = vector.shape_cast %12 : vector<1x32x32xbf16> to vector<32x32xbf16>
    %14 = arith.truncf %11 : vector<32x128xf32> to vector<32x128xbf16>
    %cst_11 = arith.constant dense<0.000000e+00> : vector<32x128xf32>
    %15 = tpu.matmul %13, %14, %cst_11 {dimension_numbers = #tpu.dot_dimension_numbers<[1], [0], [0], [1], [0, 0, 1, 1], [], []>} : vector<32x32xbf16>, vector<32x128xbf16>, vector<32x128xf32> -> vector<32x128xf32>
    %c0_12 = arith.constant 0 : index
    %c0_13 = arith.constant 0 : index
    %c0_14 = arith.constant 0 : index
    %16 = vector.load %arg6[%c0_12, %c0_13, %c0_14] : memref<10x32x1xf32, #tpu.memory_space<vmem>>, vector<1x32x1xf32>
    %17 = vector.shape_cast %16 : vector<1x32x1xf32> to vector<32x1xf32>
    %18 = vector.broadcast %17 : vector<32x1xf32> to vector<32x128xf32>
    %19 = arith.addf %15, %18 : vector<32x128xf32>
    %cst_15 = arith.constant 0.000000e+00 : f32
    %20 = vector.broadcast %cst_15 : f32 to vector<32x128xf32>
    %21 = arith.cmpf oge, %19, %20 : vector<32x128xf32>
    %cst_16 = arith.constant 1.000000e-01 : f32
    %22 = vector.broadcast %cst_16 : f32 to vector<32x128xf32>
    %23 = arith.mulf %22, %19 : vector<32x128xf32>
    %24 = arith.select %21, %19, %23 : vector<32x128xi1>, vector<32x128xf32>
    %c1 = arith.constant 1 : index
    %c0_17 = arith.constant 0 : index
    %c0_18 = arith.constant 0 : index
    %25 = vector.load %arg5[%c1, %c0_17, %c0_18] : memref<10x32x32xbf16, #tpu.memory_space<vmem>>, vector<1x32x32xbf16>
    %26 = vector.shape_cast %25 : vector<1x32x32xbf16> to vector<32x32xbf16>
    %27 = arith.truncf %24 : vector<32x128xf32> to vector<32x128xbf16>
    %cst_19 = arith.constant dense<0.000000e+00> : vector<32x128xf32>
    %28 = tpu.matmul %26, %27, %cst_19 {dimension_numbers = #tpu.dot_dimension_numbers<[1], [0], [0], [1], [0, 0, 1, 1], [], []>} : vector<32x32xbf16>, vector<32x128xbf16>, vector<32x128xf32> -> vector<32x128xf32>
    %c1_20 = arith.constant 1 : index
    %c0_21 = arith.constant 0 : index
    %c0_22 = arith.constant 0 : index
    %29 = vector.load %arg6[%c1_20, %c0_21, %c0_22] : memref<10x32x1xf32, #tpu.memory_space<vmem>>, vector<1x32x1xf32>
    %30 = vector.shape_cast %29 : vector<1x32x1xf32> to vector<32x1xf32>
    %31 = vector.broadcast %30 : vector<32x1xf32> to vector<32x128xf32>
    %32 = arith.addf %28, %31 : vector<32x128xf32>
    %33 = arith.addf %11, %32 : vector<32x128xf32>
    %c2 = arith.constant 2 : index
    %c0_23 = arith.constant 0 : index
    %c0_24 = arith.constant 0 : index
    %34 = vector.load %arg5[%c2, %c0_23, %c0_24] : memref<10x32x32xbf16, #tpu.memory_space<vmem>>, vector<1x32x32xbf16>
    %35 = vector.shape_cast %34 : vector<1x32x32xbf16> to vector<32x32xbf16>
    %36 = arith.truncf %33 : vector<32x128xf32> to vector<32x128xbf16>
    %cst_25 = arith.constant dense<0.000000e+00> : vector<32x128xf32>
    %37 = tpu.matmul %35, %36, %cst_25 {dimension_numbers = #tpu.dot_dimension_numbers<[1], [0], [0], [1], [0, 0, 1, 1], [], []>} : vector<32x32xbf16>, vector<32x128xbf16>, vector<32x128xf32> -> vector<32x128xf32>
    %c2_26 = arith.constant 2 : index
    %c0_27 = arith.constant 0 : index
    %c0_28 = arith.constant 0 : index
    %38 = vector.load %arg6[%c2_26, %c0_27, %c0_28] : memref<10x32x1xf32, #tpu.memory_space<vmem>>, vector<1x32x1xf32>
    %39 = vector.shape_cast %38 : vector<1x32x1xf32> to vector<32x1xf32>
    %40 = vector.broadcast %39 : vector<32x1xf32> to vector<32x128xf32>
    %41 = arith.addf %37, %40 : vector<32x128xf32>
    %cst_29 = arith.constant 0.000000e+00 : f32
    %42 = vector.broadcast %cst_29 : f32 to vector<32x128xf32>
    %43 = arith.cmpf oge, %41, %42 : vector<32x128xf32>
    %cst_30 = arith.constant 1.000000e-01 : f32
    %44 = vector.broadcast %cst_30 : f32 to vector<32x128xf32>
    %45 = arith.mulf %44, %41 : vector<32x128xf32>
    %46 = arith.select %43, %41, %45 : vector<32x128xi1>, vector<32x128xf32>
    %c3 = arith.constant 3 : index
    %c0_31 = arith.constant 0 : index
    %c0_32 = arith.constant 0 : index
    %47 = vector.load %arg5[%c3, %c0_31, %c0_32] : memref<10x32x32xbf16, #tpu.memory_space<vmem>>, vector<1x32x32xbf16>
    %48 = vector.shape_cast %47 : vector<1x32x32xbf16> to vector<32x32xbf16>
    %49 = arith.truncf %46 : vector<32x128xf32> to vector<32x128xbf16>
    %cst_33 = arith.constant dense<0.000000e+00> : vector<32x128xf32>
    %50 = tpu.matmul %48, %49, %cst_33 {dimension_numbers = #tpu.dot_dimension_numbers<[1], [0], [0], [1], [0, 0, 1, 1], [], []>} : vector<32x32xbf16>, vector<32x128xbf16>, vector<32x128xf32> -> vector<32x128xf32>
    %c3_34 = arith.constant 3 : index
    %c0_35 = arith.constant 0 : index
    %c0_36 = arith.constant 0 : index
    %51 = vector.load %arg6[%c3_34, %c0_35, %c0_36] : memref<10x32x1xf32, #tpu.memory_space<vmem>>, vector<1x32x1xf32>
    %52 = vector.shape_cast %51 : vector<1x32x1xf32> to vector<32x1xf32>
    %53 = vector.broadcast %52 : vector<32x1xf32> to vector<32x128xf32>
    %54 = arith.addf %50, %53 : vector<32x128xf32>
    %55 = arith.addf %33, %54 : vector<32x128xf32>
    %c4 = arith.constant 4 : index
    %c0_37 = arith.constant 0 : index
    %c0_38 = arith.constant 0 : index
    %56 = vector.load %arg5[%c4, %c0_37, %c0_38] : memref<10x32x32xbf16, #tpu.memory_space<vmem>>, vector<1x32x32xbf16>
    %57 = vector.shape_cast %56 : vector<1x32x32xbf16> to vector<32x32xbf16>
    %58 = arith.truncf %55 : vector<32x128xf32> to vector<32x128xbf16>
    %cst_39 = arith.constant dense<0.000000e+00> : vector<32x128xf32>
    %59 = tpu.matmul %57, %58, %cst_39 {dimension_numbers = #tpu.dot_dimension_numbers<[1], [0], [0], [1], [0, 0, 1, 1], [], []>} : vector<32x32xbf16>, vector<32x128xbf16>, vector<32x128xf32> -> vector<32x128xf32>
    %c4_40 = arith.constant 4 : index
    %c0_41 = arith.constant 0 : index
    %c0_42 = arith.constant 0 : index
    %60 = vector.load %arg6[%c4_40, %c0_41, %c0_42] : memref<10x32x1xf32, #tpu.memory_space<vmem>>, vector<1x32x1xf32>
    %61 = vector.shape_cast %60 : vector<1x32x1xf32> to vector<32x1xf32>
    %62 = vector.broadcast %61 : vector<32x1xf32> to vector<32x128xf32>
    %63 = arith.addf %59, %62 : vector<32x128xf32>
    %cst_43 = arith.constant 0.000000e+00 : f32
    %64 = vector.broadcast %cst_43 : f32 to vector<32x128xf32>
    %65 = arith.cmpf oge, %63, %64 : vector<32x128xf32>
    %cst_44 = arith.constant 1.000000e-01 : f32
    %66 = vector.broadcast %cst_44 : f32 to vector<32x128xf32>
    %67 = arith.mulf %66, %63 : vector<32x128xf32>
    %68 = arith.select %65, %63, %67 : vector<32x128xi1>, vector<32x128xf32>
    %c5 = arith.constant 5 : index
    %c0_45 = arith.constant 0 : index
    %c0_46 = arith.constant 0 : index
    %69 = vector.load %arg5[%c5, %c0_45, %c0_46] : memref<10x32x32xbf16, #tpu.memory_space<vmem>>, vector<1x32x32xbf16>
    %70 = vector.shape_cast %69 : vector<1x32x32xbf16> to vector<32x32xbf16>
    %71 = arith.truncf %68 : vector<32x128xf32> to vector<32x128xbf16>
    %cst_47 = arith.constant dense<0.000000e+00> : vector<32x128xf32>
    %72 = tpu.matmul %70, %71, %cst_47 {dimension_numbers = #tpu.dot_dimension_numbers<[1], [0], [0], [1], [0, 0, 1, 1], [], []>} : vector<32x32xbf16>, vector<32x128xbf16>, vector<32x128xf32> -> vector<32x128xf32>
    %c5_48 = arith.constant 5 : index
    %c0_49 = arith.constant 0 : index
    %c0_50 = arith.constant 0 : index
    %73 = vector.load %arg6[%c5_48, %c0_49, %c0_50] : memref<10x32x1xf32, #tpu.memory_space<vmem>>, vector<1x32x1xf32>
    %74 = vector.shape_cast %73 : vector<1x32x1xf32> to vector<32x1xf32>
    %75 = vector.broadcast %74 : vector<32x1xf32> to vector<32x128xf32>
    %76 = arith.addf %72, %75 : vector<32x128xf32>
    %77 = arith.addf %55, %76 : vector<32x128xf32>
    %c6 = arith.constant 6 : index
    %c0_51 = arith.constant 0 : index
    %c0_52 = arith.constant 0 : index
    %78 = vector.load %arg5[%c6, %c0_51, %c0_52] : memref<10x32x32xbf16, #tpu.memory_space<vmem>>, vector<1x32x32xbf16>
    %79 = vector.shape_cast %78 : vector<1x32x32xbf16> to vector<32x32xbf16>
    %80 = arith.truncf %77 : vector<32x128xf32> to vector<32x128xbf16>
    %cst_53 = arith.constant dense<0.000000e+00> : vector<32x128xf32>
    %81 = tpu.matmul %79, %80, %cst_53 {dimension_numbers = #tpu.dot_dimension_numbers<[1], [0], [0], [1], [0, 0, 1, 1], [], []>} : vector<32x32xbf16>, vector<32x128xbf16>, vector<32x128xf32> -> vector<32x128xf32>
    %c6_54 = arith.constant 6 : index
    %c0_55 = arith.constant 0 : index
    %c0_56 = arith.constant 0 : index
    %82 = vector.load %arg6[%c6_54, %c0_55, %c0_56] : memref<10x32x1xf32, #tpu.memory_space<vmem>>, vector<1x32x1xf32>
    %83 = vector.shape_cast %82 : vector<1x32x1xf32> to vector<32x1xf32>
    %84 = vector.broadcast %83 : vector<32x1xf32> to vector<32x128xf32>
    %85 = arith.addf %81, %84 : vector<32x128xf32>
    %cst_57 = arith.constant 0.000000e+00 : f32
    %86 = vector.broadcast %cst_57 : f32 to vector<32x128xf32>
    %87 = arith.cmpf oge, %85, %86 : vector<32x128xf32>
    %cst_58 = arith.constant 1.000000e-01 : f32
    %88 = vector.broadcast %cst_58 : f32 to vector<32x128xf32>
    %89 = arith.mulf %88, %85 : vector<32x128xf32>
    %90 = arith.select %87, %85, %89 : vector<32x128xi1>, vector<32x128xf32>
    %c7 = arith.constant 7 : index
    %c0_59 = arith.constant 0 : index
    %c0_60 = arith.constant 0 : index
    %91 = vector.load %arg5[%c7, %c0_59, %c0_60] : memref<10x32x32xbf16, #tpu.memory_space<vmem>>, vector<1x32x32xbf16>
    %92 = vector.shape_cast %91 : vector<1x32x32xbf16> to vector<32x32xbf16>
    %93 = arith.truncf %90 : vector<32x128xf32> to vector<32x128xbf16>
    %cst_61 = arith.constant dense<0.000000e+00> : vector<32x128xf32>
    %94 = tpu.matmul %92, %93, %cst_61 {dimension_numbers = #tpu.dot_dimension_numbers<[1], [0], [0], [1], [0, 0, 1, 1], [], []>} : vector<32x32xbf16>, vector<32x128xbf16>, vector<32x128xf32> -> vector<32x128xf32>
    %c7_62 = arith.constant 7 : index
    %c0_63 = arith.constant 0 : index
    %c0_64 = arith.constant 0 : index
    %95 = vector.load %arg6[%c7_62, %c0_63, %c0_64] : memref<10x32x1xf32, #tpu.memory_space<vmem>>, vector<1x32x1xf32>
    %96 = vector.shape_cast %95 : vector<1x32x1xf32> to vector<32x1xf32>
    %97 = vector.broadcast %96 : vector<32x1xf32> to vector<32x128xf32>
    %98 = arith.addf %94, %97 : vector<32x128xf32>
    %99 = arith.addf %77, %98 : vector<32x128xf32>
    %c8 = arith.constant 8 : index
    %c0_65 = arith.constant 0 : index
    %c0_66 = arith.constant 0 : index
    %100 = vector.load %arg5[%c8, %c0_65, %c0_66] : memref<10x32x32xbf16, #tpu.memory_space<vmem>>, vector<1x32x32xbf16>
    %101 = vector.shape_cast %100 : vector<1x32x32xbf16> to vector<32x32xbf16>
    %102 = arith.truncf %99 : vector<32x128xf32> to vector<32x128xbf16>
    %cst_67 = arith.constant dense<0.000000e+00> : vector<32x128xf32>
    %103 = tpu.matmul %101, %102, %cst_67 {dimension_numbers = #tpu.dot_dimension_numbers<[1], [0], [0], [1], [0, 0, 1, 1], [], []>} : vector<32x32xbf16>, vector<32x128xbf16>, vector<32x128xf32> -> vector<32x128xf32>
    %c8_68 = arith.constant 8 : index
    %c0_69 = arith.constant 0 : index
    %c0_70 = arith.constant 0 : index
    %104 = vector.load %arg6[%c8_68, %c0_69, %c0_70] : memref<10x32x1xf32, #tpu.memory_space<vmem>>, vector<1x32x1xf32>
    %105 = vector.shape_cast %104 : vector<1x32x1xf32> to vector<32x1xf32>
    %106 = vector.broadcast %105 : vector<32x1xf32> to vector<32x128xf32>
    %107 = arith.addf %103, %106 : vector<32x128xf32>
    %cst_71 = arith.constant 0.000000e+00 : f32
    %108 = vector.broadcast %cst_71 : f32 to vector<32x128xf32>
    %109 = arith.cmpf oge, %107, %108 : vector<32x128xf32>
    %cst_72 = arith.constant 1.000000e-01 : f32
    %110 = vector.broadcast %cst_72 : f32 to vector<32x128xf32>
    %111 = arith.mulf %110, %107 : vector<32x128xf32>
    %112 = arith.select %109, %107, %111 : vector<32x128xi1>, vector<32x128xf32>
    %c9 = arith.constant 9 : index
    %c0_73 = arith.constant 0 : index
    %c0_74 = arith.constant 0 : index
    %113 = vector.load %arg5[%c9, %c0_73, %c0_74] : memref<10x32x32xbf16, #tpu.memory_space<vmem>>, vector<1x32x32xbf16>
    %114 = vector.shape_cast %113 : vector<1x32x32xbf16> to vector<32x32xbf16>
    %115 = arith.truncf %112 : vector<32x128xf32> to vector<32x128xbf16>
    %cst_75 = arith.constant dense<0.000000e+00> : vector<32x128xf32>
    %116 = tpu.matmul %114, %115, %cst_75 {dimension_numbers = #tpu.dot_dimension_numbers<[1], [0], [0], [1], [0, 0, 1, 1], [], []>} : vector<32x32xbf16>, vector<32x128xbf16>, vector<32x128xf32> -> vector<32x128xf32>
    %c9_76 = arith.constant 9 : index
    %c0_77 = arith.constant 0 : index
    %c0_78 = arith.constant 0 : index
    %117 = vector.load %arg6[%c9_76, %c0_77, %c0_78] : memref<10x32x1xf32, #tpu.memory_space<vmem>>, vector<1x32x1xf32>
    %118 = vector.shape_cast %117 : vector<1x32x1xf32> to vector<32x1xf32>
    %119 = vector.broadcast %118 : vector<32x1xf32> to vector<32x128xf32>
    %120 = arith.addf %116, %119 : vector<32x128xf32>
    %121 = arith.addf %99, %120 : vector<32x128xf32>
    %122 = arith.truncf %121 : vector<32x128xf32> to vector<32x128xbf16>
    %c0_79 = arith.constant 0 : index
    %c0_80 = arith.constant 0 : index
    %123 = vector.load %arg7[%c0_79, %c0_80] : memref<144x32xbf16, #tpu.memory_space<vmem>>, vector<144x32xbf16>
    %cst_81 = arith.constant dense<0.000000e+00> : vector<144x128xf32>
    %124 = tpu.matmul %123, %122, %cst_81 {dimension_numbers = #tpu.dot_dimension_numbers<[1], [0], [0], [1], [0, 0, 1, 1], [], []>} : vector<144x32xbf16>, vector<32x128xbf16>, vector<144x128xf32> -> vector<144x128xf32>
    %c0_82 = arith.constant 0 : index
    %c0_83 = arith.constant 0 : index
    %125 = vector.load %arg8[%c0_82, %c0_83] : memref<144x1xf32, #tpu.memory_space<vmem>>, vector<144x1xf32>
    %126 = vector.broadcast %125 : vector<144x1xf32> to vector<144x128xf32>
    %127 = arith.addf %124, %126 : vector<144x128xf32>
    %128 = arith.truncf %127 : vector<144x128xf32> to vector<144x128xbf16>
    %c0_84 = arith.constant 0 : index
    %c0_85 = arith.constant 0 : index
    %c0_86 = arith.constant 0 : index
    %129 = vector.load %arg11[%c0_84, %c0_85, %c0_86] : memref<1x144x128xbf16, #tpu.memory_space<vmem>>, vector<1x144x128xbf16>
    %130 = vector.shape_cast %129 : vector<1x144x128xbf16> to vector<144x128xbf16>
    %131 = vector.shape_cast %128 : vector<144x128xbf16> to vector<1x144x128xbf16>
    tpu.vector_store %arg11[%c0_84, %c0_85, %c0_86], %131 {strides = array<i32>} : memref<1x144x128xbf16, #tpu.memory_space<vmem>>, vector<1x144x128xbf16>,
    %c0_87 = arith.constant 0 : index
    %c0_88 = arith.constant 0 : index
    %132 = vector.load %arg9[%c0_87, %c0_88] : memref<12x32xbf16, #tpu.memory_space<vmem>>, vector<12x32xbf16>
    %cst_89 = arith.constant dense<0.000000e+00> : vector<12x128xf32>
    %133 = tpu.matmul %132, %122, %cst_89 {dimension_numbers = #tpu.dot_dimension_numbers<[1], [0], [0], [1], [0, 0, 1, 1], [], []>} : vector<12x32xbf16>, vector<32x128xbf16>, vector<12x128xf32> -> vector<12x128xf32>
    %c0_90 = arith.constant 0 : index
    %c0_91 = arith.constant 0 : index
    %134 = vector.load %arg10[%c0_90, %c0_91] : memref<12x1xf32, #tpu.memory_space<vmem>>, vector<12x1xf32>
    %135 = vector.broadcast %134 : vector<12x1xf32> to vector<12x128xf32>
    %136 = arith.addf %133, %135 : vector<12x128xf32>
    %137 = arith.truncf %136 : vector<12x128xf32> to vector<12x128xbf16>
    %c0_92 = arith.constant 0 : index
    %c0_93 = arith.constant 0 : index
    %c0_94 = arith.constant 0 : index
    %138 = vector.load %arg12[%c0_92, %c0_93, %c0_94] : memref<1x12x128xbf16, #tpu.memory_space<vmem>>, vector<1x12x128xbf16>
    %139 = vector.shape_cast %138 : vector<1x12x128xbf16> to vector<12x128xbf16>
    %140 = vector.shape_cast %137 : vector<12x128xbf16> to vector<1x12x128xbf16>
    tpu.vector_store %arg12[%c0_92, %c0_93, %c0_94], %140 {strides = array<i32>} : memref<1x12x128xbf16, #tpu.memory_space<vmem>>, vector<1x12x128xbf16>,
    return
  }
  func.func @transform_0(%arg0: i32, %arg1: i32) -> (i32, i32, i32) {
    %c0_i32 = arith.constant 0 : i32
    %c0_i32_0 = arith.constant 0 : i32
    return %arg0, %c0_i32, %arg1 : i32, i32, i32
  }
  func.func @transform_1(%arg0: i32, %arg1: i32) -> (i32, i32) {
    %c0_i32 = arith.constant 0 : i32
    %c0_i32_0 = arith.constant 0 : i32
    %c0_i32_1 = arith.constant 0 : i32
    return %c0_i32, %c0_i32_0 : i32, i32
  }
  func.func @transform_2(%arg0: i32, %arg1: i32) -> (i32, i32) {
    %c0_i32 = arith.constant 0 : i32
    %c0_i32_0 = arith.constant 0 : i32
    %c0_i32_1 = arith.constant 0 : i32
    return %c0_i32, %c0_i32_0 : i32, i32
  }
  func.func @transform_3(%arg0: i32, %arg1: i32) -> (i32, i32, i32) {
    %c0_i32 = arith.constant 0 : i32
    %c0_i32_0 = arith.constant 0 : i32
    %c0_i32_1 = arith.constant 0 : i32
    %c0_i32_2 = arith.constant 0 : i32
    return %c0_i32, %c0_i32_0, %c0_i32_1 : i32, i32, i32
  }
  func.func @transform_4(%arg0: i32, %arg1: i32) -> (i32, i32, i32) {
    %c0_i32 = arith.constant 0 : i32
    %c0_i32_0 = arith.constant 0 : i32
    %c0_i32_1 = arith.constant 0 : i32
    %c0_i32_2 = arith.constant 0 : i32
    return %c0_i32, %c0_i32_0, %c0_i32_1 : i32, i32, i32
  }
  func.func @transform_5(%arg0: i32, %arg1: i32) -> (i32, i32) {
    %c0_i32 = arith.constant 0 : i32
    %c0_i32_0 = arith.constant 0 : i32
    %c0_i32_1 = arith.constant 0 : i32
    return %c0_i32, %c0_i32_0 : i32, i32
  }
  func.func @transform_6(%arg0: i32, %arg1: i32) -> (i32, i32) {
    %c0_i32 = arith.constant 0 : i32
    %c0_i32_0 = arith.constant 0 : i32
    %c0_i32_1 = arith.constant 0 : i32
    return %c0_i32, %c0_i32_0 : i32, i32
  }
  func.func @transform_7(%arg0: i32, %arg1: i32) -> (i32, i32) {
    %c0_i32 = arith.constant 0 : i32
    %c0_i32_0 = arith.constant 0 : i32
    %c0_i32_1 = arith.constant 0 : i32
    return %c0_i32, %c0_i32_0 : i32, i32
  }
  func.func @transform_8(%arg0: i32, %arg1: i32) -> (i32, i32) {
    %c0_i32 = arith.constant 0 : i32
    %c0_i32_0 = arith.constant 0 : i32
    %c0_i32_1 = arith.constant 0 : i32
    return %c0_i32, %c0_i32_0 : i32, i32
  }
  func.func @transform_9(%arg0: i32, %arg1: i32) -> (i32, i32, i32) {
    %c0_i32 = arith.constant 0 : i32
    %c0_i32_0 = arith.constant 0 : i32
    return %arg0, %c0_i32, %arg1 : i32, i32, i32
  }
  func.func @transform_10(%arg0: i32, %arg1: i32) -> (i32, i32, i32) {
    %c0_i32 = arith.constant 0 : i32
    %c0_i32_0 = arith.constant 0 : i32
    return %arg0, %c0_i32, %arg1 : i32, i32, i32
  }
}

</mosaic_0001>

<llo_original>
// kernel: kernel_predictor_forward.1
$region0: #{kernel_predictor_forward.1}
  #allocation0 [shape = 'u32[]', space=smem, size = 0x4, offset = 0x4, fixed_abs, tag = 'smem constant byte address 0x4 - core index']
  #allocation1 [shape = 'u32[144,128]{1,0:T(1,128)}', space=vmem, size = 0x12000, scoped, tag = 'internal scratch']
  %s0 = inlined_call_operand.vmem [shape: bf16[2,20,128], index: 0, kind: input, shape index: {}]
  %s1 = inlined_call_operand.vmem [shape: bf16[32,20], index: 1, kind: input, shape index: {}]
  %s2 = inlined_call_operand.vmem [shape: f32[32,1], index: 2, kind: input, shape index: {}]
  %s3 = inlined_call_operand.vmem [shape: bf16[10,32,32], index: 3, kind: input, shape index: {}]
  %s4 = inlined_call_operand.vmem [shape: f32[10,32,1], index: 4, kind: input, shape index: {}]
  %s5 = inlined_call_operand.vmem [shape: bf16[144,32], index: 5, kind: input, shape index: {}]
  %s6 = inlined_call_operand.vmem [shape: f32[144,1], index: 6, kind: input, shape index: {}]
  %s7 = inlined_call_operand.vmem [shape: bf16[12,32], index: 7, kind: input, shape index: {}]
  %s8 = inlined_call_operand.vmem [shape: f32[12,1], index: 8, kind: input, shape index: {}]
  %s9 = inlined_call_operand.vmem [shape: bf16[2,144,128], index: 9, kind: output, shape index: {0}]
  %s10 = inlined_call_operand.vmem [shape: bf16[2,12,128], index: 10, kind: output, shape index: {1}]
  %11 = xla_tuple %s9, %s10
  %s12 = sld [smem:[#allocation0]]
  $region77: #{kernel_predictor_forward.1} parent=0
    _
  %s14 = ssub.s32 1, %s12
  %s15 = scalar_select 0, %s14, %s12
  loop: start=0, step=1, limit=4
  $region2: #{kernel_predictor_forward.1} parent=0 // loop_pre_header
    _
  $region3: #{kernel_predictor_forward.1} parent=0 // loop_header
    %s17 = sphi 0, %s21
    %p18 = scmp.ge.s32.totalorder %s17, 4
    %s24 = sphi 0, %s36
    %s25 = sphi 0, %s32
    %s26 = sphi 0, %s24
    %s27 = sphi 0, %s25
    %s28 = sphi 0, %s26
    %s29 = sphi 0, %s27
    %s41 = sphi 0, %s43
    %s44 = sphi 0, %s41
    %s45 = sphi 0, %s44
    %s61 = sphi 0, %s45
    %s65 = sphi 0, %s65
    %s67 = sphi 0, %s65
    %s68 = sphi 0, %s67
    %s82 = sphi 0, %s68
    %s86 = sphi 0, %s86
    %s88 = sphi 0, %s86
    %s89 = sphi 0, %s88
    %s103 = sphi 0, %s89
    %s107 = sphi 0, %s107
    %s109 = sphi 0, %s107
    %s110 = sphi 0, %s109
    %s124 = sphi 0, %s110
    %s128 = sphi 0, %s128
    %s130 = sphi 0, %s128
    %s131 = sphi 0, %s130
    %s145 = sphi 0, %s131
    %s149 = sphi 0, %s149
    %s151 = sphi 0, %s149
    %s152 = sphi 0, %s151
    %s166 = sphi 0, %s152
    %s170 = sphi 0, %s170
    %s172 = sphi 0, %s170
    %s173 = sphi 0, %s172
    %s187 = sphi 0, %s173
    %s191 = sphi 0, %s191
    %s193 = sphi 0, %s191
    %s194 = sphi 0, %s193
    %s208 = sphi 0, %s194
    %s212 = sphi 0, %s212
    %s214 = sphi 0, %s212
    %s215 = sphi 0, %s214
    %s229 = sphi 0, %s215
    %s237 = sphi 0, %s239
    %s240 = sphi 0, %s237
    %s241 = sphi 0, %s240
    %s257 = sphi 0, %s241
    %s265 = sphi 0, %s267
    %s268 = sphi 0, %s265
    %s269 = sphi 0, %s268
    %s285 = sphi 0, %s269
  $region4: #{kernel_predictor_forward.1} parent=0 // loop_header_branch
    %20 = sbr.rel (%p18) target = $region8
  $region5: #{kernel_predictor_forward.1} parent=0 // loop_body
    %s22 = ssub.s32 %s17, 1
    %s23 = ssub.s32 %s17, 2
    %s30 = sadd.s32 1, %s25
    %p31 = scmp.ge.s32.totalorder %s30, 1
    %s32 = scalar_select %p31, 0, %s30
    %s33 = sadd.s32 1, %s24
    %s34 = scalar_select %p31, %s33, %s24
    %p35 = scmp.ge.s32.totalorder %s34, 2
    %s36 = scalar_select %p35, 0, %s34
    %s37 = ssub.s32 %s24, %s36
    %s38 = ssub.s32 %s25, %s32
    %s39 = sor.u32 %s37, %s38
    %p40 = scmp.eq.s32.totalorder %s39, 0
    %s42 = sadd.s32 %s41, 1
    %s43 = scalar_select %p40, %s41, %s42
    %p46 = pneg %p40
    %p47 = scmp.eq.s32.totalorder %s17, 1
    %p48 = por %p46, %p47
    %p49 = scmp.ne.s32.totalorder %s41, %s44
    %p50 = scmp.eq.s32.totalorder %s17, 0
    %p51 = por %p49, %p50
    %p52 = scmp.ne.s32.totalorder %s41, %s44
    %p53 = scmp.eq.s32.totalorder %s22, 1
    %p54 = por %p52, %p53
    %p55 = scmp.ne.s32.totalorder %s44, %s45
    %p56 = scmp.eq.s32.totalorder %s22, 0
    %p57 = por %p55, %p56
    %p58 = scmp.ne.s32.totalorder %s44, %s45
    %p59 = scmp.eq.s32.totalorder %s23, 1
    %p60 = por %p58, %p59
    %p62 = scmp.ne.s32.totalorder %s45, %s61
    %p63 = scmp.eq.s32.totalorder %s23, 0
    %p64 = por %p62, %p63
    %s66 = sadd.s32 %s65, 1
    %p69 = scmp.eq.s32.totalorder %s17, 1
    %p70 = scmp.ne.s32.totalorder %s65, %s67
    %p71 = scmp.eq.s32.totalorder %s17, 0
    %p72 = por %p70, %p71
    %p73 = scmp.ne.s32.totalorder %s65, %s67
    %p74 = scmp.eq.s32.totalorder %s22, 1
    %p75 = por %p73, %p74
    %p76 = scmp.ne.s32.totalorder %s67, %s68
    %p77 = scmp.eq.s32.totalorder %s22, 0
    %p78 = por %p76, %p77
    %p79 = scmp.ne.s32.totalorder %s67, %s68
    %p80 = scmp.eq.s32.totalorder %s23, 1
    %p81 = por %p79, %p80
    %p83 = scmp.ne.s32.totalorder %s68, %s82
    %p84 = scmp.eq.s32.totalorder %s23, 0
    %p85 = por %p83, %p84
    %s87 = sadd.s32 %s86, 1
    %p90 = scmp.eq.s32.totalorder %s17, 1
    %p91 = scmp.ne.s32.totalorder %s86, %s88
    %p92 = scmp.eq.s32.totalorder %s17, 0
    %p93 = por %p91, %p92
    %p94 = scmp.ne.s32.totalorder %s86, %s88
    %p95 = scmp.eq.s32.totalorder %s22, 1
    %p96 = por %p94, %p95
    %p97 = scmp.ne.s32.totalorder %s88, %s89
    %p98 = scmp.eq.s32.totalorder %s22, 0
    %p99 = por %p97, %p98
    %p100 = scmp.ne.s32.totalorder %s88, %s89
    %p101 = scmp.eq.s32.totalorder %s23, 1
    %p102 = por %p100, %p101
    %p104 = scmp.ne.s32.totalorder %s89, %s103
    %p105 = scmp.eq.s32.totalorder %s23, 0
    %p106 = por %p104, %p105
    %s108 = sadd.s32 %s107, 1
    %p111 = scmp.eq.s32.totalorder %s17, 1
    %p112 = scmp.ne.s32.totalorder %s107, %s109
    %p113 = scmp.eq.s32.totalorder %s17, 0
    %p114 = por %p112, %p113
    %p115 = scmp.ne.s32.totalorder %s107, %s109
    %p116 = scmp.eq.s32.totalorder %s22, 1
    %p117 = por %p115, %p116
    %p118 = scmp.ne.s32.totalorder %s109, %s110
    %p119 = scmp.eq.s32.totalorder %s22, 0
    %p120 = por %p118, %p119
    %p121 = scmp.ne.s32.totalorder %s109, %s110
    %p122 = scmp.eq.s32.totalorder %s23, 1
    %p123 = por %p121, %p122
    %p125 = scmp.ne.s32.totalorder %s110, %s124
    %p126 = scmp.eq.s32.totalorder %s23, 0
    %p127 = por %p125, %p126
    %s129 = sadd.s32 %s128, 1
    %p132 = scmp.eq.s32.totalorder %s17, 1
    %p133 = scmp.ne.s32.totalorder %s128, %s130
    %p134 = scmp.eq.s32.totalorder %s17, 0
    %p135 = por %p133, %p134
    %p136 = scmp.ne.s32.totalorder %s128, %s130
    %p137 = scmp.eq.s32.totalorder %s22, 1
    %p138 = por %p136, %p137
    %p139 = scmp.ne.s32.totalorder %s130, %s131
    %p140 = scmp.eq.s32.totalorder %s22, 0
    %p141 = por %p139, %p140
    %p142 = scmp.ne.s32.totalorder %s130, %s131
    %p143 = scmp.eq.s32.totalorder %s23, 1
    %p144 = por %p142, %p143
    %p146 = scmp.ne.s32.totalorder %s131, %s145
    %p147 = scmp.eq.s32.totalorder %s23, 0
    %p148 = por %p146, %p147
    %s150 = sadd.s32 %s149, 1
    %p153 = scmp.eq.s32.totalorder %s17, 1
    %p154 = scmp.ne.s32.totalorder %s149, %s151
    %p155 = scmp.eq.s32.totalorder %s17, 0
    %p156 = por %p154, %p155
    %p157 = scmp.ne.s32.totalorder %s149, %s151
    %p158 = scmp.eq.s32.totalorder %s22, 1
    %p159 = por %p157, %p158
    %p160 = scmp.ne.s32.totalorder %s151, %s152
    %p161 = scmp.eq.s32.totalorder %s22, 0
    %p162 = por %p160, %p161
    %p163 = scmp.ne.s32.totalorder %s151, %s152
    %p164 = scmp.eq.s32.totalorder %s23, 1
    %p165 = por %p163, %p164
    %p167 = scmp.ne.s32.totalorder %s152, %s166
    %p168 = scmp.eq.s32.totalorder %s23, 0
    %p169 = por %p167, %p168
    %s171 = sadd.s32 %s170, 1
    %p174 = scmp.eq.s32.totalorder %s17, 1
    %p175 = scmp.ne.s32.totalorder %s170, %s172
    %p176 = scmp.eq.s32.totalorder %s17, 0
    %p177 = por %p175, %p176
    %p178 = scmp.ne.s32.totalorder %s170, %s172
    %p179 = scmp.eq.s32.totalorder %s22, 1
    %p180 = por %p178, %p179
    %p181 = scmp.ne.s32.totalorder %s172, %s173
    %p182 = scmp.eq.s32.totalorder %s22, 0
    %p183 = por %p181, %p182
    %p184 = scmp.ne.s32.totalorder %s172, %s173
    %p185 = scmp.eq.s32.totalorder %s23, 1
    %p186 = por %p184, %p185
    %p188 = scmp.ne.s32.totalorder %s173, %s187
    %p189 = scmp.eq.s32.totalorder %s23, 0
    %p190 = por %p188, %p189
    %s192 = sadd.s32 %s191, 1
    %p195 = scmp.eq.s32.totalorder %s17, 1
    %p196 = scmp.ne.s32.totalorder %s191, %s193
    %p197 = scmp.eq.s32.totalorder %s17, 0
    %p198 = por %p196, %p197
    %p199 = scmp.ne.s32.totalorder %s191, %s193
    %p200 = scmp.eq.s32.totalorder %s22, 1
    %p201 = por %p199, %p200
    %p202 = scmp.ne.s32.totalorder %s193, %s194
    %p203 = scmp.eq.s32.totalorder %s22, 0
    %p204 = por %p202, %p203
    %p205 = scmp.ne.s32.totalorder %s193, %s194
    %p206 = scmp.eq.s32.totalorder %s23, 1
    %p207 = por %p205, %p206
    %p209 = scmp.ne.s32.totalorder %s194, %s208
    %p210 = scmp.eq.s32.totalorder %s23, 0
    %p211 = por %p209, %p210
    %s213 = sadd.s32 %s212, 1
    %p216 = scmp.eq.s32.totalorder %s17, 1
    %p217 = scmp.ne.s32.totalorder %s212, %s214
    %p218 = scmp.eq.s32.totalorder %s17, 0
    %p219 = por %p217, %p218
    %p220 = scmp.ne.s32.totalorder %s212, %s214
    %p221 = scmp.eq.s32.totalorder %s22, 1
    %p222 = por %p220, %p221
    %p223 = scmp.ne.s32.totalorder %s214, %s215
    %p224 = scmp.eq.s32.totalorder %s22, 0
    %p225 = por %p223, %p224
    %p226 = scmp.ne.s32.totalorder %s214, %s215
    %p227 = scmp.eq.s32.totalorder %s23, 1
    %p228 = por %p226, %p227
    %p230 = scmp.ne.s32.totalorder %s215, %s229
    %p231 = scmp.eq.s32.totalorder %s23, 0
    %p232 = por %p230, %p231
    %s233 = ssub.s32 %s24, %s36
    %s234 = ssub.s32 %s25, %s32
    %s235 = sor.u32 %s233, %s234
    %p236 = scmp.eq.s32.totalorder %s235, 0
    %s238 = sadd.s32 %s237, 1
    %s239 = scalar_select %p236, %s237, %s238
    %p242 = pneg %p236
    %p243 = scmp.eq.s32.totalorder %s17, 1
    %p244 = por %p242, %p243
    %p245 = scmp.ne.s32.totalorder %s237, %s240
    %p246 = scmp.eq.s32.totalorder %s17, 0
    %p247 = por %p245, %p246
    %p248 = scmp.ne.s32.totalorder %s237, %s240
    %p249 = scmp.eq.s32.totalorder %s22, 1
    %p250 = por %p248, %p249
    %p251 = scmp.ne.s32.totalorder %s240, %s241
    %p252 = scmp.eq.s32.totalorder %s22, 0
    %p253 = por %p251, %p252
    %p254 = scmp.ne.s32.totalorder %s240, %s241
    %p255 = scmp.eq.s32.totalorder %s23, 1
    %p256 = por %p254, %p255
    %p258 = scmp.ne.s32.totalorder %s241, %s257
    %p259 = scmp.eq.s32.totalorder %s23, 0
    %p260 = por %p258, %p259
    %s261 = ssub.s32 %s24, %s36
    %s262 = ssub.s32 %s25, %s32
    %s263 = sor.u32 %s261, %s262
    %p264 = scmp.eq.s32.totalorder %s263, 0
    %s266 = sadd.s32 %s265, 1
    %s267 = scalar_select %p264, %s265, %s266
    %p270 = pneg %p264
    %p271 = scmp.eq.s32.totalorder %s17, 1
    %p272 = por %p270, %p271
    %p273 = scmp.ne.s32.totalorder %s265, %s268
    %p274 = scmp.eq.s32.totalorder %s17, 0
    %p275 = por %p273, %p274
    %p276 = scmp.ne.s32.totalorder %s265, %s268
    %p277 = scmp.eq.s32.totalorder %s22, 1
    %p278 = por %p276, %p277
    %p279 = scmp.ne.s32.totalorder %s268, %s269
    %p280 = scmp.eq.s32.totalorder %s22, 0
    %p281 = por %p279, %p280
    %p282 = scmp.ne.s32.totalorder %s268, %s269
    %p283 = scmp.eq.s32.totalorder %s23, 1
    %p284 = por %p282, %p283
    %p286 = scmp.ne.s32.totalorder %s269, %s285
    %p287 = scmp.eq.s32.totalorder %s23, 0
    %p288 = por %p286, %p287
    %p289 = scmp.le.s32.totalorder 1, %s17
    %p290 = scmp.lt.s32.totalorder %s17, 3
    %p291 = pnand %p289, %p290
    %p292 = pneg %p291
    // Predicated region
    $region9: #{kernel_predictor_forward.1} parent=5 // pred_check
      _
    $region10: #{kernel_predictor_forward.1} parent=5 // pred_check_branch
      %294 = sbr.rel (%p291) target = $region12
    $region11: #{kernel_predictor_forward.1} parent=5 // pred_region
      %s295 = ssub.s32 %s17, 1
      // Predicated region
      $region13: #{kernel_predictor_forward.1} parent=11 // pred_check
        %p296 = pneg %p78
      $region14: #{kernel_predictor_forward.1} parent=11 // pred_check_branch
        %298 = sbr.rel (%p296) target = $region16
      $region15: #{kernel_predictor_forward.1} parent=11 // pred_region
        _
      $region16: #{kernel_predictor_forward.1} parent=11 // pred_fallthru
        _
      // Predicated region
      $region17: #{kernel_predictor_forward.1} parent=11 // pred_check
        %p299 = pneg %p99
      $region18: #{kernel_predictor_forward.1} parent=11 // pred_check_branch
        %301 = sbr.rel (%p299) target = $region20
      $region19: #{kernel_predictor_forward.1} parent=11 // pred_region
        _
      $region20: #{kernel_predictor_forward.1} parent=11 // pred_fallthru
        _
      // Predicated region
      $region21: #{kernel_predictor_forward.1} parent=11 // pred_check
        %p302 = pneg %p120
      $region22: #{kernel_predictor_forward.1} parent=11 // pred_check_branch
        %304 = sbr.rel (%p302) target = $region24
      $region23: #{kernel_predictor_forward.1} parent=11 // pred_region
        _
      $region24: #{kernel_predictor_forward.1} parent=11 // pred_fallthru
        _
      // Predicated region
      $region25: #{kernel_predictor_forward.1} parent=11 // pred_check
        %p305 = pneg %p141
      $region26: #{kernel_predictor_forward.1} parent=11 // pred_check_branch
        %307 = sbr.rel (%p305) target = $region28
      $region27: #{kernel_predictor_forward.1} parent=11 // pred_region
        _
      $region28: #{kernel_predictor_forward.1} parent=11 // pred_fallthru
        _
      // Predicated region
      $region29: #{kernel_predictor_forward.1} parent=11 // pred_check
        %p308 = pneg %p162
      $region30: #{kernel_predictor_forward.1} parent=11 // pred_check_branch
        %310 = sbr.rel (%p308) target = $region32
      $region31: #{kernel_predictor_forward.1} parent=11 // pred_region
        _
      $region32: #{kernel_predictor_forward.1} parent=11 // pred_fallthru
        _
      // Predicated region
      $region33: #{kernel_predictor_forward.1} parent=11 // pred_check
        %p311 = pneg %p183
      $region34: #{kernel_predictor_forward.1} parent=11 // pred_check_branch
        %313 = sbr.rel (%p311) target = $region36
      $region35: #{kernel_predictor_forward.1} parent=11 // pred_region
        _
      $region36: #{kernel_predictor_forward.1} parent=11 // pred_fallthru
        _
      // Predicated region
      $region37: #{kernel_predictor_forward.1} parent=11 // pred_check
        %p314 = pneg %p204
      $region38: #{kernel_predictor_forward.1} parent=11 // pred_check_branch
        %316 = sbr.rel (%p314) target = $region40
      $region39: #{kernel_predictor_forward.1} parent=11 // pred_region
        _
      $region40: #{kernel_predictor_forward.1} parent=11 // pred_fallthru
        _
      // Predicated region
      $region41: #{kernel_predictor_forward.1} parent=11 // pred_check
        %p317 = pneg %p225
      $region42: #{kernel_predictor_forward.1} parent=11 // pred_check_branch
        %319 = sbr.rel (%p317) target = $region44
      $region43: #{kernel_predictor_forward.1} parent=11 // pred_region
        _
      $region44: #{kernel_predictor_forward.1} parent=11 // pred_fallthru
        _
    $region12: #{kernel_predictor_forward.1} parent=5 // pred_fallthru
      _
    %p320 = scmp.lt.s32.totalorder %s17, 2
    // Predicated region
    $region45: #{kernel_predictor_forward.1} parent=5 // pred_check
      %p321 = pneg %p320
    $region46: #{kernel_predictor_forward.1} parent=5 // pred_check_branch
      %323 = sbr.rel (%p321) target = $region48
    $region47: #{kernel_predictor_forward.1} parent=5 // pred_region
      // Predicated region
      $region49: #{kernel_predictor_forward.1} parent=47 // pred_check
        %p324 = pneg %p51
      $region50: #{kernel_predictor_forward.1} parent=47 // pred_check_branch
        %326 = sbr.rel (%p324) target = $region52
      $region51: #{kernel_predictor_forward.1} parent=47 // pred_region
        %p327 = scmp.lt.s32.totalorder %s24, 1
        %s328 = scalar_select %p327, %s24, 1
        %p329 = scmp.lt.s32.totalorder %s25, 0
        %s330 = scalar_select %p329, %s25, 0
        %s331 = smul.addr %s328, 3
        %s332 = sadd.s32 %s330, %s331
        %s333 = smul.addr %s332, 4
        %s334 = scalar_lea.vmem %s0, %s333
      $region52: #{kernel_predictor_forward.1} parent=47 // pred_fallthru
        _
    $region48: #{kernel_predictor_forward.1} parent=5 // pred_fallthru
      _
    %p335 = scmp.le.s32.totalorder 1, %s17
    %p336 = scmp.lt.s32.totalorder %s17, 3
    %p337 = pnand %p335, %p336
    %p338 = pneg %p337
    // Predicated region
    $region53: #{kernel_predictor_forward.1} parent=5 // pred_check
      _
    $region54: #{kernel_predictor_forward.1} parent=5 // pred_check_branch
      %340 = sbr.rel (%p337) target = $region56
    $region55: #{kernel_predictor_forward.1} parent=5 // pred_region
      %s341 = ssub.s32 %s17, 1
      %p342 = scmp.lt.s32.totalorder %s26, 1
      %s343 = scalar_select %p342, %s26, 1
      %p344 = scmp.lt.s32.totalorder %s27, 0
      %s345 = scalar_select %p344, %s27, 0
      %s346 = smul.addr %s343, 3
      %s347 = sadd.s32 %s345, %s346
      %s348 = smul.addr %s347, 4
      %s349 = scalar_lea.vmem %s0, %s348
      %p350 = pneg %p57
      %p351 = pneg %p54
      %p352 = pneg %p78
      %p353 = pneg %p75
      %p354 = pneg %p99
      %p355 = pneg %p96
      %p356 = pneg %p120
      %p357 = pneg %p117
      %p358 = pneg %p141
      %p359 = pneg %p138
      %p360 = pneg %p162
      %p361 = pneg %p159
      %p362 = pneg %p183
      %p363 = pneg %p180
      %p364 = pneg %p204
      %p365 = pneg %p201
      %p366 = pneg %p225
      %p367 = pneg %p222
      %p368 = pneg %p253
      %p369 = pneg %p250
      %p370 = scmp.lt.s32.totalorder %s26, 1
      %s371 = scalar_select %p370, %s26, 1
      %p372 = scmp.lt.s32.totalorder %s27, 0
      %s373 = scalar_select %p372, %s27, 0
      %s374 = smul.addr %s371, 18
      %s375 = sadd.s32 %s373, %s374
      %s376 = smul.addr %s375, 4
      %s377 = scalar_lea.vmem %s9, %s376
      %p378 = pneg %p281
      %p379 = pneg %p278
      %p380 = scmp.lt.s32.totalorder %s26, 1
      %s381 = scalar_select %p380, %s26, 1
      %p382 = scmp.lt.s32.totalorder %s27, 0
      %s383 = scalar_select %p382, %s27, 0
      %s384 = smul.addr %s381, 2
      %s385 = sadd.s32 %s383, %s384
      %s386 = smul.addr %s385, 4
      %s387 = scalar_lea.vmem %s10, %s386
      %p388 = scmp.lt.s32.totalorder %s26, 1
      %s389 = scalar_select %p388, %s26, 1
      %p390 = scmp.lt.s32.totalorder %s27, 0
      %s391 = scalar_select %p390, %s27, 0
      %s392 = smul.addr %s389, 3
      %s393 = sadd.s32 %s391, %s392
      %s394 = smul.addr %s393, 4
      %s395 = scalar_lea.vmem %s0, %s394
      %p396 = scmp.lt.s32.totalorder %s26, 1
      %s397 = scalar_select %p396, %s26, 1
      %p398 = scmp.lt.s32.totalorder %s27, 0
      %s399 = scalar_select %p398, %s27, 0
      %s400 = smul.addr %s397, 18
      %s401 = sadd.s32 %s399, %s400
      %s402 = smul.addr %s401, 4
      %s403 = scalar_lea.vmem %s9, %s402
      %p404 = scmp.lt.s32.totalorder %s26, 1
      %s405 = scalar_select %p404, %s26, 1
      %p406 = scmp.lt.s32.totalorder %s27, 0
      %s407 = scalar_select %p406, %s27, 0
      %s408 = smul.addr %s405, 2
      %s409 = sadd.s32 %s407, %s408
      %s410 = smul.addr %s409, 4
      %s411 = scalar_lea.vmem %s10, %s410
      %v413 = vld [vmem:[%s395] sm:$0xf]
      %v414 = vld [vmem:[%s395 + $0x4] sm:$0xf]
      %v415 = vld [vmem:[%s395 + $0x8] sm:$0x3]
      %v416 = vld [vmem:[%s1] sm:$0xf]
      %v417 = vld [vmem:[%s1 + $0x4] sm:$0xf]
      %v418 = vld [vmem:[%s1 + $0x8] sm:$0xf]
      %v419 = vld [vmem:[%s1 + $0xc] sm:$0xf]
      %v420 = vld [vmem:[%s2] sm:$0xff]
      %v421 = vld [vmem:[%s2 + $0x8] sm:$0xff]
      %v422 = vld [vmem:[%s2 + $0x10] sm:$0xff]
      %v423 = vld [vmem:[%s2 + $0x18] sm:$0xff]
      %425 = vset.pattern.permute.xlu0 0
      %426 = vperm.xlu0 %425, %v420
      %v427 = vpop.permute.xlu0 %426
      %430 = vset.pattern.permute.xlu0 0
      %431 = vperm.xlu0 %430, %v421
      %v432 = vpop.permute.xlu0 %431
      %435 = vset.pattern.permute.xlu0 0
      %436 = vperm.xlu0 %435, %v422
      %v437 = vpop.permute.xlu0 %436
      %440 = vset.pattern.permute.xlu0 0
      %441 = vperm.xlu0 %440, %v423
      %v442 = vpop.permute.xlu0 %441
      %v448 = vunpack.c.l.b16 %v416
      %v449 = vunpack.c.l.b16 %v417
      %v450 = vunpack.c.l.b16 %v418
      %v451 = vunpack.c.l.b16 %v419
      %v452 = vpack.c.b16 %v449, %v448
      %v453 = vpack.c.b16 %v451, %v450
      %v457 = vunpack.c.l.b16 %v413
      %v458 = vunpack.c.l.b16 %v414
      %v459 = vunpack.c.l.b16 %v415
      %v460 = vpack.c.b16 %v458, %v457
      %v461 = vpack.c.b16 %v459, %v459
      %vm463 = vcmask 162816
      %v465 = vsel %vm463, %v452, 0
      %v468 = vsel %vm463, %v453, 0
      %vm470 = vcmask 1041408
      %v472 = vsel %vm470, %v461, 0
      %474 = vmatprep.subr.bf16.mxu0 0
      %475 = vmatpush1.bf16.msra.mxu0 %v460
      %476 = vmatprep.subr.bf16.mxu0 0
      %477 = vmatpush1.bf16.msra.mxu0 %v472
      %478 = vmatprep.subr.bf16.mxu0 0
      %479 = vmatpush1.bf16.msra.mxu0 0
      %480 = vmatprep.subr.bf16.mxu0 0
      %481 = vmatpush1.bf16.msra.mxu0 0
      %482 = vmatprep.subr.bf16.mxu0 0
      %483 = vmatpush1.bf16.msra.mxu0 0
      %484 = vmatprep.subr.bf16.mxu0 0
      %485 = vmatpush1.bf16.msra.mxu0 0
      %486 = vmatprep.subr.bf16.mxu0 0
      %487 = vmatpush1.bf16.msra.mxu0 0
      %488 = vmatprep.subr.bf16.mxu0 0
      %489 = vmatpush1.bf16.msra.mxu0 0
      %490 = vmatprep.subr.bf16.mxu0 0
      %491 = vmatpush1.bf16.msra.mxu0 0
      %492 = vmatprep.subr.bf16.mxu0 0
      %493 = vmatpush1.bf16.msra.mxu0 0
      %494 = vmatprep.subr.bf16.mxu0 0
      %495 = vmatpush1.bf16.msra.mxu0 0
      %496 = vmatprep.subr.bf16.mxu0 0
      %497 = vmatpush1.bf16.msra.mxu0 0
      %498 = vmatprep.subr.bf16.mxu0 0
      %499 = vmatpush1.bf16.msra.mxu0 0
      %500 = vmatprep.subr.bf16.mxu0 0
      %501 = vmatpush1.bf16.msra.mxu0 0
      %502 = vmatprep.subr.bf16.mxu0 0
      %503 = vmatpush1.bf16.msra.mxu0 0
      %504 = vmatprep.subr.bf16.mxu0 0
      %505 = vmatpush1.bf16.msra.mxu0 0
      %506 = vmatprep.mubr.bf16.mxu0 0
      %507 = vmatmul.mubr.bf16.gmra.mrb[0].mxu0 %v465
      %v508 = vpop.f32.mrb[0].mxu0
      %v509 = vadd.f32 %v427, %v508
      %v510 = vpop.f32.mrb[0].mxu0
      %v511 = vpop.f32.mrb[0].mxu0
      %v512 = vadd.f32 %v432, %v511
      %v513 = vpop.f32.mrb[0].mxu0
      %514 = vmatprep.mubr.bf16.mxu0 0
      %515 = vmatmul.mubr.bf16.gmra.mrb[0].mxu0 %v468
      %v516 = vpop.f32.mrb[0].mxu0
      %v517 = vadd.f32 %v437, %v516
      %v518 = vpop.f32.mrb[0].mxu0
      %v519 = vpop.f32.mrb[0].mxu0
      %v520 = vadd.f32 %v442, %v519
      %v521 = vpop.f32.mrb[0].mxu0
      %522 = vdwg.mxu0
      %vm523 = vcmp.ge.f32.partialorder %v509, 0.0
      %vm524 = vcmp.ge.f32.partialorder %v512, 0.0
      %vm525 = vcmp.ge.f32.partialorder %v517, 0.0
      %vm526 = vcmp.ge.f32.partialorder %v520, 0.0
      %v527 = vmul.f32 %v509, 0.1
      %v528 = vmul.f32 %v512, 0.1
      %v529 = vmul.f32 %v517, 0.1
      %v530 = vmul.f32 %v520, 0.1
      %v531 = vsel %vm523, %v509, %v527
      %v532 = vsel %vm524, %v512, %v528
      %v533 = vsel %vm525, %v517, %v529
      %v534 = vsel %vm526, %v520, %v530
      %v535 = vld [vmem:[%s3] sm:$0xf]
      %v536 = vld [vmem:[%s3 + $0x4] sm:$0xf]
      %v537 = vld [vmem:[%s3 + $0x8] sm:$0xf]
      %v538 = vld [vmem:[%s3 + $0xc] sm:$0xf]
      %v539 = vpack.c.bf16 %v532, %v531
      %v540 = vpack.c.bf16 %v534, %v533
      %v541 = vld [vmem:[%s4] sm:$0xff]
      %v542 = vld [vmem:[%s4 + $0x8] sm:$0xff]
      %v543 = vld [vmem:[%s4 + $0x10] sm:$0xff]
      %v544 = vld [vmem:[%s4 + $0x18] sm:$0xff]
      %546 = vset.pattern.permute.xlu0 0
      %547 = vperm.xlu0 %546, %v541
      %v548 = vpop.permute.xlu0 %547
      %551 = vset.pattern.permute.xlu0 0
      %552 = vperm.xlu0 %551, %v542
      %v553 = vpop.permute.xlu0 %552
      %556 = vset.pattern.permute.xlu0 0
      %557 = vperm.xlu0 %556, %v543
      %v558 = vpop.permute.xlu0 %557
      %561 = vset.pattern.permute.xlu0 0
      %562 = vperm.xlu0 %561, %v544
      %v563 = vpop.permute.xlu0 %562
      %v569 = vunpack.c.l.b16 %v535
      %v570 = vunpack.c.l.b16 %v536
      %v571 = vunpack.c.l.b16 %v537
      %v572 = vunpack.c.l.b16 %v538
      %v573 = vpack.c.b16 %v570, %v569
      %v574 = vpack.c.b16 %v572, %v571
      %vm575 = vcmask 261120
      %v577 = vsel %vm575, %v573, 0
      %v580 = vsel %vm575, %v574, 0
      %582 = vmatprep.subr.bf16.mxu0 0
      %583 = vmatpush1.bf16.msra.mxu0 %v539
      %584 = vmatprep.subr.bf16.mxu0 0
      %585 = vmatpush1.bf16.msra.mxu0 %v540
      %586 = vmatprep.subr.bf16.mxu0 0
      %587 = vmatpush1.bf16.msra.mxu0 0
      %588 = vmatprep.subr.bf16.mxu0 0
      %589 = vmatpush1.bf16.msra.mxu0 0
      %590 = vmatprep.subr.bf16.mxu0 0
      %591 = vmatpush1.bf16.msra.mxu0 0
      %592 = vmatprep.subr.bf16.mxu0 0
      %593 = vmatpush1.bf16.msra.mxu0 0
      %594 = vmatprep.subr.bf16.mxu0 0
      %595 = vmatpush1.bf16.msra.mxu0 0
      %596 = vmatprep.subr.bf16.mxu0 0
      %597 = vmatpush1.bf16.msra.mxu0 0
      %598 = vmatprep.subr.bf16.mxu0 0
      %599 = vmatpush1.bf16.msra.mxu0 0
      %600 = vmatprep.subr.bf16.mxu0 0
      %601 = vmatpush1.bf16.msra.mxu0 0
      %602 = vmatprep.subr.bf16.mxu0 0
      %603 = vmatpush1.bf16.msra.mxu0 0
      %604 = vmatprep.subr.bf16.mxu0 0
      %605 = vmatpush1.bf16.msra.mxu0 0
      %606 = vmatprep.subr.bf16.mxu0 0
      %607 = vmatpush1.bf16.msra.mxu0 0
      %608 = vmatprep.subr.bf16.mxu0 0
      %609 = vmatpush1.bf16.msra.mxu0 0
      %610 = vmatprep.subr.bf16.mxu0 0
      %611 = vmatpush1.bf16.msra.mxu0 0
      %612 = vmatprep.subr.bf16.mxu0 0
      %613 = vmatpush1.bf16.msra.mxu0 0
      %614 = vmatprep.mubr.bf16.mxu0 0
      %615 = vmatmul.mubr.bf16.gmra.mrb[0].mxu0 %v577
      %v616 = vpop.f32.mrb[0].mxu0
      %v617 = vadd.f32 %v548, %v616
      %v618 = vpop.f32.mrb[0].mxu0
      %v619 = vpop.f32.mrb[0].mxu0
      %v620 = vadd.f32 %v553, %v619
      %v621 = vpop.f32.mrb[0].mxu0
      %622 = vmatprep.mubr.bf16.mxu0 0
      %623 = vmatmul.mubr.bf16.gmra.mrb[0].mxu0 %v580
      %v624 = vpop.f32.mrb[0].mxu0
      %v625 = vadd.f32 %v558, %v624
      %v626 = vpop.f32.mrb[0].mxu0
      %v627 = vpop.f32.mrb[0].mxu0
      %v628 = vadd.f32 %v563, %v627
      %v629 = vpop.f32.mrb[0].mxu0
      %630 = vdwg.mxu0
      %vm631 = vcmp.ge.f32.partialorder %v617, 0.0
      %vm632 = vcmp.ge.f32.partialorder %v620, 0.0
      %vm633 = vcmp.ge.f32.partialorder %v625, 0.0
      %vm634 = vcmp.ge.f32.partialorder %v628, 0.0
      %v635 = vmul.f32 %v617, 0.1
      %v636 = vmul.f32 %v620, 0.1
      %v637 = vmul.f32 %v625, 0.1
      %v638 = vmul.f32 %v628, 0.1
      %v639 = vsel %vm631, %v617, %v635
      %v640 = vsel %vm632, %v620, %v636
      %v641 = vsel %vm633, %v625, %v637
      %v642 = vsel %vm634, %v628, %v638
      %s643 = scalar_lea.vmem %s3, 16
      %v644 = vld [vmem:[%s643] sm:$0xf]
      %v645 = vld [vmem:[%s643 + $0x4] sm:$0xf]
      %v646 = vld [vmem:[%s643 + $0x8] sm:$0xf]
      %v647 = vld [vmem:[%s643 + $0xc] sm:$0xf]
      %v648 = vpack.c.bf16 %v640, %v639
      %v649 = vpack.c.bf16 %v642, %v641
      %s650 = scalar_lea.vmem %s4, 32
      %v651 = vld [vmem:[%s650] sm:$0xff]
      %v652 = vld [vmem:[%s650 + $0x8] sm:$0xff]
      %v653 = vld [vmem:[%s650 + $0x10] sm:$0xff]
      %v654 = vld [vmem:[%s650 + $0x18] sm:$0xff]
      %656 = vset.pattern.permute.xlu0 0
      %657 = vperm.xlu0 %656, %v651
      %v658 = vpop.permute.xlu0 %657
      %661 = vset.pattern.permute.xlu0 0
      %662 = vperm.xlu0 %661, %v652
      %v663 = vpop.permute.xlu0 %662
      %666 = vset.pattern.permute.xlu0 0
      %667 = vperm.xlu0 %666, %v653
      %v668 = vpop.permute.xlu0 %667
      %671 = vset.pattern.permute.xlu0 0
      %672 = vperm.xlu0 %671, %v654
      %v673 = vpop.permute.xlu0 %672
      %v679 = vunpack.c.l.b16 %v644
      %v680 = vunpack.c.l.b16 %v645
      %v681 = vunpack.c.l.b16 %v646
      %v682 = vunpack.c.l.b16 %v647
      %v683 = vpack.c.b16 %v680, %v679
      %v684 = vpack.c.b16 %v682, %v681
      %v686 = vsel %vm575, %v683, 0
      %v689 = vsel %vm575, %v684, 0
      %691 = vmatprep.subr.bf16.mxu0 0
      %692 = vmatpush1.bf16.msra.mxu0 %v648
      %693 = vmatprep.subr.bf16.mxu0 0
      %694 = vmatpush1.bf16.msra.mxu0 %v649
      %695 = vmatprep.subr.bf16.mxu0 0
      %696 = vmatpush1.bf16.msra.mxu0 0
      %697 = vmatprep.subr.bf16.mxu0 0
      %698 = vmatpush1.bf16.msra.mxu0 0
      %699 = vmatprep.subr.bf16.mxu0 0
      %700 = vmatpush1.bf16.msra.mxu0 0
      %701 = vmatprep.subr.bf16.mxu0 0
      %702 = vmatpush1.bf16.msra.mxu0 0
      %703 = vmatprep.subr.bf16.mxu0 0
      %704 = vmatpush1.bf16.msra.mxu0 0
      %705 = vmatprep.subr.bf16.mxu0 0
      %706 = vmatpush1.bf16.msra.mxu0 0
      %707 = vmatprep.subr.bf16.mxu0 0
      %708 = vmatpush1.bf16.msra.mxu0 0
      %709 = vmatprep.subr.bf16.mxu0 0
      %710 = vmatpush1.bf16.msra.mxu0 0
      %711 = vmatprep.subr.bf16.mxu0 0
      %712 = vmatpush1.bf16.msra.mxu0 0
      %713 = vmatprep.subr.bf16.mxu0 0
      %714 = vmatpush1.bf16.msra.mxu0 0
      %715 = vmatprep.subr.bf16.mxu0 0
      %716 = vmatpush1.bf16.msra.mxu0 0
      %717 = vmatprep.subr.bf16.mxu0 0
      %718 = vmatpush1.bf16.msra.mxu0 0
      %719 = vmatprep.subr.bf16.mxu0 0
      %720 = vmatpush1.bf16.msra.mxu0 0
      %721 = vmatprep.subr.bf16.mxu0 0
      %722 = vmatpush1.bf16.msra.mxu0 0
      %723 = vmatprep.mubr.bf16.mxu0 0
      %724 = vmatmul.mubr.bf16.gmra.mrb[0].mxu0 %v686
      %v725 = vpop.f32.mrb[0].mxu0
      %v726 = vadd.f32 %v658, %v725
      %v727 = vpop.f32.mrb[0].mxu0
      %v728 = vpop.f32.mrb[0].mxu0
      %v729 = vadd.f32 %v663, %v728
      %v730 = vpop.f32.mrb[0].mxu0
      %731 = vmatprep.mubr.bf16.mxu0 0
      %732 = vmatmul.mubr.bf16.gmra.mrb[0].mxu0 %v689
      %v733 = vpop.f32.mrb[0].mxu0
      %v734 = vadd.f32 %v668, %v733
      %v735 = vpop.f32.mrb[0].mxu0
      %v736 = vpop.f32.mrb[0].mxu0
      %v737 = vadd.f32 %v673, %v736
      %v738 = vpop.f32.mrb[0].mxu0
      %739 = vdwg.mxu0
      %v740 = vadd.f32 %v531, %v726
      %v741 = vadd.f32 %v532, %v729
      %v742 = vadd.f32 %v533, %v734
      %v743 = vadd.f32 %v534, %v737
      %s744 = scalar_lea.vmem %s3, 32
      %v745 = vld [vmem:[%s744] sm:$0xf]
      %v746 = vld [vmem:[%s744 + $0x4] sm:$0xf]
      %v747 = vld [vmem:[%s744 + $0x8] sm:$0xf]
      %v748 = vld [vmem:[%s744 + $0xc] sm:$0xf]
      %v749 = vpack.c.bf16 %v741, %v740
      %v750 = vpack.c.bf16 %v743, %v742
      %s751 = scalar_lea.vmem %s4, 64
      %v752 = vld [vmem:[%s751] sm:$0xff]
      %v753 = vld [vmem:[%s751 + $0x8] sm:$0xff]
      %v754 = vld [vmem:[%s751 + $0x10] sm:$0xff]
      %v755 = vld [vmem:[%s751 + $0x18] sm:$0xff]
      %757 = vset.pattern.permute.xlu0 0
      %758 = vperm.xlu0 %757, %v752
      %v759 = vpop.permute.xlu0 %758
      %762 = vset.pattern.permute.xlu0 0
      %763 = vperm.xlu0 %762, %v753
      %v764 = vpop.permute.xlu0 %763
      %767 = vset.pattern.permute.xlu0 0
      %768 = vperm.xlu0 %767, %v754
      %v769 = vpop.permute.xlu0 %768
      %772 = vset.pattern.permute.xlu0 0
      %773 = vperm.xlu0 %772, %v755
      %v774 = vpop.permute.xlu0 %773
      %v780 = vunpack.c.l.b16 %v745
      %v781 = vunpack.c.l.b16 %v746
      %v782 = vunpack.c.l.b16 %v747
      %v783 = vunpack.c.l.b16 %v748
      %v784 = vpack.c.b16 %v781, %v780
      %v785 = vpack.c.b16 %v783, %v782
      %v787 = vsel %vm575, %v784, 0
      %v790 = vsel %vm575, %v785, 0
      %792 = vmatprep.subr.bf16.mxu0 0
      %793 = vmatpush1.bf16.msra.mxu0 %v749
      %794 = vmatprep.subr.bf16.mxu0 0
      %795 = vmatpush1.bf16.msra.mxu0 %v750
      %796 = vmatprep.subr.bf16.mxu0 0
      %797 = vmatpush1.bf16.msra.mxu0 0
      %798 = vmatprep.subr.bf16.mxu0 0
      %799 = vmatpush1.bf16.msra.mxu0 0
      %800 = vmatprep.subr.bf16.mxu0 0
      %801 = vmatpush1.bf16.msra.mxu0 0
      %802 = vmatprep.subr.bf16.mxu0 0
      %803 = vmatpush1.bf16.msra.mxu0 0
      %804 = vmatprep.subr.bf16.mxu0 0
      %805 = vmatpush1.bf16.msra.mxu0 0
      %806 = vmatprep.subr.bf16.mxu0 0
      %807 = vmatpush1.bf16.msra.mxu0 0
      %808 = vmatprep.subr.bf16.mxu0 0
      %809 = vmatpush1.bf16.msra.mxu0 0
      %810 = vmatprep.subr.bf16.mxu0 0
      %811 = vmatpush1.bf16.msra.mxu0 0
      %812 = vmatprep.subr.bf16.mxu0 0
      %813 = vmatpush1.bf16.msra.mxu0 0
      %814 = vmatprep.subr.bf16.mxu0 0
      %815 = vmatpush1.bf16.msra.mxu0 0
      %816 = vmatprep.subr.bf16.mxu0 0
      %817 = vmatpush1.bf16.msra.mxu0 0
      %818 = vmatprep.subr.bf16.mxu0 0
      %819 = vmatpush1.bf16.msra.mxu0 0
      %820 = vmatprep.subr.bf16.mxu0 0
      %821 = vmatpush1.bf16.msra.mxu0 0
      %822 = vmatprep.subr.bf16.mxu0 0
      %823 = vmatpush1.bf16.msra.mxu0 0
      %824 = vmatprep.mubr.bf16.mxu0 0
      %825 = vmatmul.mubr.bf16.gmra.mrb[0].mxu0 %v787
      %v826 = vpop.f32.mrb[0].mxu0
      %v827 = vadd.f32 %v759, %v826
      %v828 = vpop.f32.mrb[0].mxu0
      %v829 = vpop.f32.mrb[0].mxu0
      %v830 = vadd.f32 %v764, %v829
      %v831 = vpop.f32.mrb[0].mxu0
      %832 = vmatprep.mubr.bf16.mxu0 0
      %833 = vmatmul.mubr.bf16.gmra.mrb[0].mxu0 %v790
      %v834 = vpop.f32.mrb[0].mxu0
      %v835 = vadd.f32 %v769, %v834
      %v836 = vpop.f32.mrb[0].mxu0
      %v837 = vpop.f32.mrb[0].mxu0
      %v838 = vadd.f32 %v774, %v837
      %v839 = vpop.f32.mrb[0].mxu0
      %840 = vdwg.mxu0
      %vm841 = vcmp.ge.f32.partialorder %v827, 0.0
      %vm842 = vcmp.ge.f32.partialorder %v830, 0.0
      %vm843 = vcmp.ge.f32.partialorder %v835, 0.0
      %vm844 = vcmp.ge.f32.partialorder %v838, 0.0
      %v845 = vmul.f32 %v827, 0.1
      %v846 = vmul.f32 %v830, 0.1
      %v847 = vmul.f32 %v835, 0.1
      %v848 = vmul.f32 %v838, 0.1
      %v849 = vsel %vm841, %v827, %v845
      %v850 = vsel %vm842, %v830, %v846
      %v851 = vsel %vm843, %v835, %v847
      %v852 = vsel %vm844, %v838, %v848
      %s853 = scalar_lea.vmem %s3, 48
      %v854 = vld [vmem:[%s853] sm:$0xf]
      %v855 = vld [vmem:[%s853 + $0x4] sm:$0xf]
      %v856 = vld [vmem:[%s853 + $0x8] sm:$0xf]
      %v857 = vld [vmem:[%s853 + $0xc] sm:$0xf]
      %v858 = vpack.c.bf16 %v850, %v849
      %v859 = vpack.c.bf16 %v852, %v851
      %s860 = scalar_lea.vmem %s4, 96
      %v861 = vld [vmem:[%s860] sm:$0xff]
      %v862 = vld [vmem:[%s860 + $0x8] sm:$0xff]
      %v863 = vld [vmem:[%s860 + $0x10] sm:$0xff]
      %v864 = vld [vmem:[%s860 + $0x18] sm:$0xff]
      %866 = vset.pattern.permute.xlu0 0
      %867 = vperm.xlu0 %866, %v861
      %v868 = vpop.permute.xlu0 %867
      %871 = vset.pattern.permute.xlu0 0
      %872 = vperm.xlu0 %871, %v862
      %v873 = vpop.permute.xlu0 %872
      %876 = vset.pattern.permute.xlu0 0
      %877 = vperm.xlu0 %876, %v863
      %v878 = vpop.permute.xlu0 %877
      %881 = vset.pattern.permute.xlu0 0
      %882 = vperm.xlu0 %881, %v864
      %v883 = vpop.permute.xlu0 %882
      %v889 = vunpack.c.l.b16 %v854
      %v890 = vunpack.c.l.b16 %v855
      %v891 = vunpack.c.l.b16 %v856
      %v892 = vunpack.c.l.b16 %v857
      %v893 = vpack.c.b16 %v890, %v889
      %v894 = vpack.c.b16 %v892, %v891
      %v896 = vsel %vm575, %v893, 0
      %v899 = vsel %vm575, %v894, 0
      %901 = vmatprep.subr.bf16.mxu0 0
      %902 = vmatpush1.bf16.msra.mxu0 %v858
      %903 = vmatprep.subr.bf16.mxu0 0
      %904 = vmatpush1.bf16.msra.mxu0 %v859
      %905 = vmatprep.subr.bf16.mxu0 0
      %906 = vmatpush1.bf16.msra.mxu0 0
      %907 = vmatprep.subr.bf16.mxu0 0
      %908 = vmatpush1.bf16.msra.mxu0 0
      %909 = vmatprep.subr.bf16.mxu0 0
      %910 = vmatpush1.bf16.msra.mxu0 0
      %911 = vmatprep.subr.bf16.mxu0 0
      %912 = vmatpush1.bf16.msra.mxu0 0
      %913 = vmatprep.subr.bf16.mxu0 0
      %914 = vmatpush1.bf16.msra.mxu0 0
      %915 = vmatprep.subr.bf16.mxu0 0
      %916 = vmatpush1.bf16.msra.mxu0 0
      %917 = vmatprep.subr.bf16.mxu0 0
      %918 = vmatpush1.bf16.msra.mxu0 0
      %919 = vmatprep.subr.bf16.mxu0 0
      %920 = vmatpush1.bf16.msra.mxu0 0
      %921 = vmatprep.subr.bf16.mxu0 0
      %922 = vmatpush1.bf16.msra.mxu0 0
      %923 = vmatprep.subr.bf16.mxu0 0
      %924 = vmatpush1.bf16.msra.mxu0 0
      %925 = vmatprep.subr.bf16.mxu0 0
      %926 = vmatpush1.bf16.msra.mxu0 0
      %927 = vmatprep.subr.bf16.mxu0 0
      %928 = vmatpush1.bf16.msra.mxu0 0
      %929 = vmatprep.subr.bf16.mxu0 0
      %930 = vmatpush1.bf16.msra.mxu0 0
      %931 = vmatprep.subr.bf16.mxu0 0
      %932 = vmatpush1.bf16.msra.mxu0 0
      %933 = vmatprep.mubr.bf16.mxu0 0
      %934 = vmatmul.mubr.bf16.gmra.mrb[0].mxu0 %v896
      %v935 = vpop.f32.mrb[0].mxu0
      %v936 = vadd.f32 %v868, %v935
      %v937 = vpop.f32.mrb[0].mxu0
      %v938 = vpop.f32.mrb[0].mxu0
      %v939 = vadd.f32 %v873, %v938
      %v940 = vpop.f32.mrb[0].mxu0
      %941 = vmatprep.mubr.bf16.mxu0 0
      %942 = vmatmul.mubr.bf16.gmra.mrb[0].mxu0 %v899
      %v943 = vpop.f32.mrb[0].mxu0
      %v944 = vadd.f32 %v878, %v943
      %v945 = vpop.f32.mrb[0].mxu0
      %v946 = vpop.f32.mrb[0].mxu0
      %v947 = vadd.f32 %v883, %v946
      %v948 = vpop.f32.mrb[0].mxu0
      %949 = vdwg.mxu0
      %v950 = vadd.f32 %v740, %v936
      %v951 = vadd.f32 %v741, %v939
      %v952 = vadd.f32 %v742, %v944
      %v953 = vadd.f32 %v743, %v947
      %s954 = scalar_lea.vmem %s3, 64
      %v955 = vld [vmem:[%s954] sm:$0xf]
      %v956 = vld [vmem:[%s954 + $0x4] sm:$0xf]
      %v957 = vld [vmem:[%s954 + $0x8] sm:$0xf]
      %v958 = vld [vmem:[%s954 + $0xc] sm:$0xf]
      %v959 = vpack.c.bf16 %v951, %v950
      %v960 = vpack.c.bf16 %v953, %v952
      %s961 = scalar_lea.vmem %s4, 128
      %v962 = vld [vmem:[%s961] sm:$0xff]
      %v963 = vld [vmem:[%s961 + $0x8] sm:$0xff]
      %v964 = vld [vmem:[%s961 + $0x10] sm:$0xff]
      %v965 = vld [vmem:[%s961 + $0x18] sm:$0xff]
      %967 = vset.pattern.permute.xlu0 0
      %968 = vperm.xlu0 %967, %v962
      %v969 = vpop.permute.xlu0 %968
      %972 = vset.pattern.permute.xlu0 0
      %973 = vperm.xlu0 %972, %v963
      %v974 = vpop.permute.xlu0 %973
      %977 = vset.pattern.permute.xlu0 0
      %978 = vperm.xlu0 %977, %v964
      %v979 = vpop.permute.xlu0 %978
      %982 = vset.pattern.permute.xlu0 0
      %983 = vperm.xlu0 %982, %v965
      %v984 = vpop.permute.xlu0 %983
      %v990 = vunpack.c.l.b16 %v955
      %v991 = vunpack.c.l.b16 %v956
      %v992 = vunpack.c.l.b16 %v957
      %v993 = vunpack.c.l.b16 %v958
      %v994 = vpack.c.b16 %v991, %v990
      %v995 = vpack.c.b16 %v993, %v992
      %v997 = vsel %vm575, %v994, 0
      %v1000 = vsel %vm575, %v995, 0
      %1002 = vmatprep.subr.bf16.mxu0 0
      %1003 = vmatpush1.bf16.msra.mxu0 %v959
      %1004 = vmatprep.subr.bf16.mxu0 0
      %1005 = vmatpush1.bf16.msra.mxu0 %v960
      %1006 = vmatprep.subr.bf16.mxu0 0
      %1007 = vmatpush1.bf16.msra.mxu0 0
      %1008 = vmatprep.subr.bf16.mxu0 0
      %1009 = vmatpush1.bf16.msra.mxu0 0
      %1010 = vmatprep.subr.bf16.mxu0 0
      %1011 = vmatpush1.bf16.msra.mxu0 0
      %1012 = vmatprep.subr.bf16.mxu0 0
      %1013 = vmatpush1.bf16.msra.mxu0 0
      %1014 = vmatprep.subr.bf16.mxu0 0
      %1015 = vmatpush1.bf16.msra.mxu0 0
      %1016 = vmatprep.subr.bf16.mxu0 0
      %1017 = vmatpush1.bf16.msra.mxu0 0
      %1018 = vmatprep.subr.bf16.mxu0 0
      %1019 = vmatpush1.bf16.msra.mxu0 0
      %1020 = vmatprep.subr.bf16.mxu0 0
      %1021 = vmatpush1.bf16.msra.mxu0 0
      %1022 = vmatprep.subr.bf16.mxu0 0
      %1023 = vmatpush1.bf16.msra.mxu0 0
      %1024 = vmatprep.subr.bf16.mxu0 0
      %1025 = vmatpush1.bf16.msra.mxu0 0
      %1026 = vmatprep.subr.bf16.mxu0 0
      %1027 = vmatpush1.bf16.msra.mxu0 0
      %1028 = vmatprep.subr.bf16.mxu0 0
      %1029 = vmatpush1.bf16.msra.mxu0 0
      %1030 = vmatprep.subr.bf16.mxu0 0
      %1031 = vmatpush1.bf16.msra.mxu0 0
      %1032 = vmatprep.subr.bf16.mxu0 0
      %1033 = vmatpush1.bf16.msra.mxu0 0
      %1034 = vmatprep.mubr.bf16.mxu0 0
      %1035 = vmatmul.mubr.bf16.gmra.mrb[0].mxu0 %v997
      %v1036 = vpop.f32.mrb[0].mxu0
      %v1037 = vadd.f32 %v969, %v1036
      %v1038 = vpop.f32.mrb[0].mxu0
      %v1039 = vpop.f32.mrb[0].mxu0
      %v1040 = vadd.f32 %v974, %v1039
      %v1041 = vpop.f32.mrb[0].mxu0
      %1042 = vmatprep.mubr.bf16.mxu0 0
      %1043 = vmatmul.mubr.bf16.gmra.mrb[0].mxu0 %v1000
      %v1044 = vpop.f32.mrb[0].mxu0
      %v1045 = vadd.f32 %v979, %v1044
      %v1046 = vpop.f32.mrb[0].mxu0
      %v1047 = vpop.f32.mrb[0].mxu0
      %v1048 = vadd.f32 %v984, %v1047
      %v1049 = vpop.f32.mrb[0].mxu0
      %1050 = vdwg.mxu0
      %vm1051 = vcmp.ge.f32.partialorder %v1037, 0.0
      %vm1052 = vcmp.ge.f32.partialorder %v1040, 0.0
      %vm1053 = vcmp.ge.f32.partialorder %v1045, 0.0
      %vm1054 = vcmp.ge.f32.partialorder %v1048, 0.0
      %v1055 = vmul.f32 %v1037, 0.1
      %v1056 = vmul.f32 %v1040, 0.1
      %v1057 = vmul.f32 %v1045, 0.1
      %v1058 = vmul.f32 %v1048, 0.1
      %v1059 = vsel %vm1051, %v1037, %v1055
      %v1060 = vsel %vm1052, %v1040, %v1056
      %v1061 = vsel %vm1053, %v1045, %v1057
      %v1062 = vsel %vm1054, %v1048, %v1058
      %s1063 = scalar_lea.vmem %s3, 80
      %v1064 = vld [vmem:[%s1063] sm:$0xf]
      %v1065 = vld [vmem:[%s1063 + $0x4] sm:$0xf]
      %v1066 = vld [vmem:[%s1063 + $0x8] sm:$0xf]
      %v1067 = vld [vmem:[%s1063 + $0xc] sm:$0xf]
      %v1068 = vpack.c.bf16 %v1060, %v1059
      %v1069 = vpack.c.bf16 %v1062, %v1061
      %s1070 = scalar_lea.vmem %s4, 160
      %v1071 = vld [vmem:[%s1070] sm:$0xff]
      %v1072 = vld [vmem:[%s1070 + $0x8] sm:$0xff]
      %v1073 = vld [vmem:[%s1070 + $0x10] sm:$0xff]
      %v1074 = vld [vmem:[%s1070 + $0x18] sm:$0xff]
      %1076 = vset.pattern.permute.xlu0 0
      %1077 = vperm.xlu0 %1076, %v1071
      %v1078 = vpop.permute.xlu0 %1077
      %1081 = vset.pattern.permute.xlu0 0
      %1082 = vperm.xlu0 %1081, %v1072
      %v1083 = vpop.permute.xlu0 %1082
      %1086 = vset.pattern.permute.xlu0 0
      %1087 = vperm.xlu0 %1086, %v1073
      %v1088 = vpop.permute.xlu0 %1087
      %1091 = vset.pattern.permute.xlu0 0
      %1092 = vperm.xlu0 %1091, %v1074
      %v1093 = vpop.permute.xlu0 %1092
      %v1099 = vunpack.c.l.b16 %v1064
      %v1100 = vunpack.c.l.b16 %v1065
      %v1101 = vunpack.c.l.b16 %v1066
      %v1102 = vunpack.c.l.b16 %v1067
      %v1103 = vpack.c.b16 %v1100, %v1099
      %v1104 = vpack.c.b16 %v1102, %v1101
      %v1106 = vsel %vm575, %v1103, 0
      %v1109 = vsel %vm575, %v1104, 0
      %1111 = vmatprep.subr.bf16.mxu0 0
      %1112 = vmatpush1.bf16.msra.mxu0 %v1068
      %1113 = vmatprep.subr.bf16.mxu0 0
      %1114 = vmatpush1.bf16.msra.mxu0 %v1069
      %1115 = vmatprep.subr.bf16.mxu0 0
      %1116 = vmatpush1.bf16.msra.mxu0 0
      %1117 = vmatprep.subr.bf16.mxu0 0
      %1118 = vmatpush1.bf16.msra.mxu0 0
      %1119 = vmatprep.subr.bf16.mxu0 0
      %1120 = vmatpush1.bf16.msra.mxu0 0
      %1121 = vmatprep.subr.bf16.mxu0 0
      %1122 = vmatpush1.bf16.msra.mxu0 0
      %1123 = vmatprep.subr.bf16.mxu0 0
      %1124 = vmatpush1.bf16.msra.mxu0 0
      %1125 = vmatprep.subr.bf16.mxu0 0
      %1126 = vmatpush1.bf16.msra.mxu0 0
      %1127 = vmatprep.subr.bf16.mxu0 0
      %1128 = vmatpush1.bf16.msra.mxu0 0
      %1129 = vmatprep.subr.bf16.mxu0 0
      %1130 = vmatpush1.bf16.msra.mxu0 0
      %1131 = vmatprep.subr.bf16.mxu0 0
      %1132 = vmatpush1.bf16.msra.mxu0 0
      %1133 = vmatprep.subr.bf16.mxu0 0
      %1134 = vmatpush1.bf16.msra.mxu0 0
      %1135 = vmatprep.subr.bf16.mxu0 0
      %1136 = vmatpush1.bf16.msra.mxu0 0
      %1137 = vmatprep.subr.bf16.mxu0 0
      %1138 = vmatpush1.bf16.msra.mxu0 0
      %1139 = vmatprep.subr.bf16.mxu0 0
      %1140 = vmatpush1.bf16.msra.mxu0 0
      %1141 = vmatprep.subr.bf16.mxu0 0
      %1142 = vmatpush1.bf16.msra.mxu0 0
      %1143 = vmatprep.mubr.bf16.mxu0 0
      %1144 = vmatmul.mubr.bf16.gmra.mrb[0].mxu0 %v1106
      %v1145 = vpop.f32.mrb[0].mxu0
      %v1146 = vadd.f32 %v1078, %v1145
      %v1147 = vpop.f32.mrb[0].mxu0
      %v1148 = vpop.f32.mrb[0].mxu0
      %v1149 = vadd.f32 %v1083, %v1148
      %v1150 = vpop.f32.mrb[0].mxu0
      %1151 = vmatprep.mubr.bf16.mxu0 0
      %1152 = vmatmul.mubr.bf16.gmra.mrb[0].mxu0 %v1109
      %v1153 = vpop.f32.mrb[0].mxu0
      %v1154 = vadd.f32 %v1088, %v1153
      %v1155 = vpop.f32.mrb[0].mxu0
      %v1156 = vpop.f32.mrb[0].mxu0
      %v1157 = vadd.f32 %v1093, %v1156
      %v1158 = vpop.f32.mrb[0].mxu0
      %1159 = vdwg.mxu0
      %v1160 = vadd.f32 %v950, %v1146
      %v1161 = vadd.f32 %v951, %v1149
      %v1162 = vadd.f32 %v952, %v1154
      %v1163 = vadd.f32 %v953, %v1157
      %s1164 = scalar_lea.vmem %s3, 96
      %v1165 = vld [vmem:[%s1164] sm:$0xf]
      %v1166 = vld [vmem:[%s1164 + $0x4] sm:$0xf]
      %v1167 = vld [vmem:[%s1164 + $0x8] sm:$0xf]
      %v1168 = vld [vmem:[%s1164 + $0xc] sm:$0xf]
      %v1169 = vpack.c.bf16 %v1161, %v1160
      %v1170 = vpack.c.bf16 %v1163, %v1162
      %s1171 = scalar_lea.vmem %s4, 192
      %v1172 = vld [vmem:[%s1171] sm:$0xff]
      %v1173 = vld [vmem:[%s1171 + $0x8] sm:$0xff]
      %v1174 = vld [vmem:[%s1171 + $0x10] sm:$0xff]
      %v1175 = vld [vmem:[%s1171 + $0x18] sm:$0xff]
      %1177 = vset.pattern.permute.xlu0 0
      %1178 = vperm.xlu0 %1177, %v1172
      %v1179 = vpop.permute.xlu0 %1178
      %1182 = vset.pattern.permute.xlu0 0
      %1183 = vperm.xlu0 %1182, %v1173
      %v1184 = vpop.permute.xlu0 %1183
      %1187 = vset.pattern.permute.xlu0 0
      %1188 = vperm.xlu0 %1187, %v1174
      %v1189 = vpop.permute.xlu0 %1188
      %1192 = vset.pattern.permute.xlu0 0
      %1193 = vperm.xlu0 %1192, %v1175
      %v1194 = vpop.permute.xlu0 %1193
      %v1200 = vunpack.c.l.b16 %v1165
      %v1201 = vunpack.c.l.b16 %v1166
      %v1202 = vunpack.c.l.b16 %v1167
      %v1203 = vunpack.c.l.b16 %v1168
      %v1204 = vpack.c.b16 %v1201, %v1200
      %v1205 = vpack.c.b16 %v1203, %v1202
      %v1207 = vsel %vm575, %v1204, 0
      %v1210 = vsel %vm575, %v1205, 0
      %1212 = vmatprep.subr.bf16.mxu0 0
      %1213 = vmatpush1.bf16.msra.mxu0 %v1169
      %1214 = vmatprep.subr.bf16.mxu0 0
      %1215 = vmatpush1.bf16.msra.mxu0 %v1170
      %1216 = vmatprep.subr.bf16.mxu0 0
      %1217 = vmatpush1.bf16.msra.mxu0 0
      %1218 = vmatprep.subr.bf16.mxu0 0
      %1219 = vmatpush1.bf16.msra.mxu0 0
      %1220 = vmatprep.subr.bf16.mxu0 0
      %1221 = vmatpush1.bf16.msra.mxu0 0
      %1222 = vmatprep.subr.bf16.mxu0 0
      %1223 = vmatpush1.bf16.msra.mxu0 0
      %1224 = vmatprep.subr.bf16.mxu0 0
      %1225 = vmatpush1.bf16.msra.mxu0 0
      %1226 = vmatprep.subr.bf16.mxu0 0
      %1227 = vmatpush1.bf16.msra.mxu0 0
      %1228 = vmatprep.subr.bf16.mxu0 0
      %1229 = vmatpush1.bf16.msra.mxu0 0
      %1230 = vmatprep.subr.bf16.mxu0 0
      %1231 = vmatpush1.bf16.msra.mxu0 0
      %1232 = vmatprep.subr.bf16.mxu0 0
      %1233 = vmatpush1.bf16.msra.mxu0 0
      %1234 = vmatprep.subr.bf16.mxu0 0
      %1235 = vmatpush1.bf16.msra.mxu0 0
      %1236 = vmatprep.subr.bf16.mxu0 0
      %1237 = vmatpush1.bf16.msra.mxu0 0
      %1238 = vmatprep.subr.bf16.mxu0 0
      %1239 = vmatpush1.bf16.msra.mxu0 0
      %1240 = vmatprep.subr.bf16.mxu0 0
      %1241 = vmatpush1.bf16.msra.mxu0 0
      %1242 = vmatprep.subr.bf16.mxu0 0
      %1243 = vmatpush1.bf16.msra.mxu0 0
      %1244 = vmatprep.mubr.bf16.mxu0 0
      %1245 = vmatmul.mubr.bf16.gmra.mrb[0].mxu0 %v1207
      %v1246 = vpop.f32.mrb[0].mxu0
      %v1247 = vadd.f32 %v1179, %v1246
      %v1248 = vpop.f32.mrb[0].mxu0
      %v1249 = vpop.f32.mrb[0].mxu0
      %v1250 = vadd.f32 %v1184, %v1249
      %v1251 = vpop.f32.mrb[0].mxu0
      %1252 = vmatprep.mubr.bf16.mxu0 0
      %1253 = vmatmul.mubr.bf16.gmra.mrb[0].mxu0 %v1210
      %v1254 = vpop.f32.mrb[0].mxu0
      %v1255 = vadd.f32 %v1189, %v1254
      %v1256 = vpop.f32.mrb[0].mxu0
      %v1257 = vpop.f32.mrb[0].mxu0
      %v1258 = vadd.f32 %v1194, %v1257
      %v1259 = vpop.f32.mrb[0].mxu0
      %1260 = vdwg.mxu0
      %vm1261 = vcmp.ge.f32.partialorder %v1247, 0.0
      %vm1262 = vcmp.ge.f32.partialorder %v1250, 0.0
      %vm1263 = vcmp.ge.f32.partialorder %v1255, 0.0
      %vm1264 = vcmp.ge.f32.partialorder %v1258, 0.0
      %v1265 = vmul.f32 %v1247, 0.1
      %v1266 = vmul.f32 %v1250, 0.1
      %v1267 = vmul.f32 %v1255, 0.1
      %v1268 = vmul.f32 %v1258, 0.1
      %v1269 = vsel %vm1261, %v1247, %v1265
      %v1270 = vsel %vm1262, %v1250, %v1266
      %v1271 = vsel %vm1263, %v1255, %v1267
      %v1272 = vsel %vm1264, %v1258, %v1268
      %s1273 = scalar_lea.vmem %s3, 112
      %v1274 = vld [vmem:[%s1273] sm:$0xf]
      %v1275 = vld [vmem:[%s1273 + $0x4] sm:$0xf]
      %v1276 = vld [vmem:[%s1273 + $0x8] sm:$0xf]
      %v1277 = vld [vmem:[%s1273 + $0xc] sm:$0xf]
      %v1278 = vpack.c.bf16 %v1270, %v1269
      %v1279 = vpack.c.bf16 %v1272, %v1271
      %s1280 = scalar_lea.vmem %s4, 224
      %v1281 = vld [vmem:[%s1280] sm:$0xff]
      %v1282 = vld [vmem:[%s1280 + $0x8] sm:$0xff]
      %v1283 = vld [vmem:[%s1280 + $0x10] sm:$0xff]
      %v1284 = vld [vmem:[%s1280 + $0x18] sm:$0xff]
      %1286 = vset.pattern.permute.xlu0 0
      %1287 = vperm.xlu0 %1286, %v1281
      %v1288 = vpop.permute.xlu0 %1287
      %1291 = vset.pattern.permute.xlu0 0
      %1292 = vperm.xlu0 %1291, %v1282
      %v1293 = vpop.permute.xlu0 %1292
      %1296 = vset.pattern.permute.xlu0 0
      %1297 = vperm.xlu0 %1296, %v1283
      %v1298 = vpop.permute.xlu0 %1297
      %1301 = vset.pattern.permute.xlu0 0
      %1302 = vperm.xlu0 %1301, %v1284
      %v1303 = vpop.permute.xlu0 %1302
      %v1309 = vunpack.c.l.b16 %v1274
      %v1310 = vunpack.c.l.b16 %v1275
      %v1311 = vunpack.c.l.b16 %v1276
      %v1312 = vunpack.c.l.b16 %v1277
      %v1313 = vpack.c.b16 %v1310, %v1309
      %v1314 = vpack.c.b16 %v1312, %v1311
      %v1316 = vsel %vm575, %v1313, 0
      %v1319 = vsel %vm575, %v1314, 0
      %1321 = vmatprep.subr.bf16.mxu0 0
      %1322 = vmatpush1.bf16.msra.mxu0 %v1278
      %1323 = vmatprep.subr.bf16.mxu0 0
      %1324 = vmatpush1.bf16.msra.mxu0 %v1279
      %1325 = vmatprep.subr.bf16.mxu0 0
      %1326 = vmatpush1.bf16.msra.mxu0 0
      %1327 = vmatprep.subr.bf16.mxu0 0
      %1328 = vmatpush1.bf16.msra.mxu0 0
      %1329 = vmatprep.subr.bf16.mxu0 0
      %1330 = vmatpush1.bf16.msra.mxu0 0
      %1331 = vmatprep.subr.bf16.mxu0 0
      %1332 = vmatpush1.bf16.msra.mxu0 0
      %1333 = vmatprep.subr.bf16.mxu0 0
      %1334 = vmatpush1.bf16.msra.mxu0 0
      %1335 = vmatprep.subr.bf16.mxu0 0
      %1336 = vmatpush1.bf16.msra.mxu0 0
      %1337 = vmatprep.subr.bf16.mxu0 0
      %1338 = vmatpush1.bf16.msra.mxu0 0
      %1339 = vmatprep.subr.bf16.mxu0 0
      %1340 = vmatpush1.bf16.msra.mxu0 0
      %1341 = vmatprep.subr.bf16.mxu0 0
      %1342 = vmatpush1.bf16.msra.mxu0 0
      %1343 = vmatprep.subr.bf16.mxu0 0
      %1344 = vmatpush1.bf16.msra.mxu0 0
      %1345 = vmatprep.subr.bf16.mxu0 0
      %1346 = vmatpush1.bf16.msra.mxu0 0
      %1347 = vmatprep.subr.bf16.mxu0 0
      %1348 = vmatpush1.bf16.msra.mxu0 0
      %1349 = vmatprep.subr.bf16.mxu0 0
      %1350 = vmatpush1.bf16.msra.mxu0 0
      %1351 = vmatprep.subr.bf16.mxu0 0
      %1352 = vmatpush1.bf16.msra.mxu0 0
      %1353 = vmatprep.mubr.bf16.mxu0 0
      %1354 = vmatmul.mubr.bf16.gmra.mrb[0].mxu0 %v1316
      %v1355 = vpop.f32.mrb[0].mxu0
      %v1356 = vadd.f32 %v1288, %v1355
      %v1357 = vpop.f32.mrb[0].mxu0
      %v1358 = vpop.f32.mrb[0].mxu0
      %v1359 = vadd.f32 %v1293, %v1358
      %v1360 = vpop.f32.mrb[0].mxu0
      %1361 = vmatprep.mubr.bf16.mxu0 0
      %1362 = vmatmul.mubr.bf16.gmra.mrb[0].mxu0 %v1319
      %v1363 = vpop.f32.mrb[0].mxu0
      %v1364 = vadd.f32 %v1298, %v1363
      %v1365 = vpop.f32.mrb[0].mxu0
      %v1366 = vpop.f32.mrb[0].mxu0
      %v1367 = vadd.f32 %v1303, %v1366
      %v1368 = vpop.f32.mrb[0].mxu0
      %1369 = vdwg.mxu0
      %v1370 = vadd.f32 %v1160, %v1356
      %v1371 = vadd.f32 %v1161, %v1359
      %v1372 = vadd.f32 %v1162, %v1364
      %v1373 = vadd.f32 %v1163, %v1367
      %s1374 = scalar_lea.vmem %s3, 128
      %v1375 = vld [vmem:[%s1374] sm:$0xf]
      %v1376 = vld [vmem:[%s1374 + $0x4] sm:$0xf]
      %v1377 = vld [vmem:[%s1374 + $0x8] sm:$0xf]
      %v1378 = vld [vmem:[%s1374 + $0xc] sm:$0xf]
      %v1379 = vpack.c.bf16 %v1371, %v1370
      %v1380 = vpack.c.bf16 %v1373, %v1372
      %s1381 = scalar_lea.vmem %s4, 256
      %v1382 = vld [vmem:[%s1381] sm:$0xff]
      %v1383 = vld [vmem:[%s1381 + $0x8] sm:$0xff]
      %v1384 = vld [vmem:[%s1381 + $0x10] sm:$0xff]
      %v1385 = vld [vmem:[%s1381 + $0x18] sm:$0xff]
      %1387 = vset.pattern.permute.xlu0 0
      %1388 = vperm.xlu0 %1387, %v1382
      %v1389 = vpop.permute.xlu0 %1388
      %1392 = vset.pattern.permute.xlu0 0
      %1393 = vperm.xlu0 %1392, %v1383
      %v1394 = vpop.permute.xlu0 %1393
      %1397 = vset.pattern.permute.xlu0 0
      %1398 = vperm.xlu0 %1397, %v1384
      %v1399 = vpop.permute.xlu0 %1398
      %1402 = vset.pattern.permute.xlu0 0
      %1403 = vperm.xlu0 %1402, %v1385
      %v1404 = vpop.permute.xlu0 %1403
      %v1410 = vunpack.c.l.b16 %v1375
      %v1411 = vunpack.c.l.b16 %v1376
      %v1412 = vunpack.c.l.b16 %v1377
      %v1413 = vunpack.c.l.b16 %v1378
      %v1414 = vpack.c.b16 %v1411, %v1410
      %v1415 = vpack.c.b16 %v1413, %v1412
      %v1417 = vsel %vm575, %v1414, 0
      %v1420 = vsel %vm575, %v1415, 0
      %1422 = vmatprep.subr.bf16.mxu0 0
      %1423 = vmatpush1.bf16.msra.mxu0 %v1379
      %1424 = vmatprep.subr.bf16.mxu0 0
      %1425 = vmatpush1.bf16.msra.mxu0 %v1380
      %1426 = vmatprep.subr.bf16.mxu0 0
      %1427 = vmatpush1.bf16.msra.mxu0 0
      %1428 = vmatprep.subr.bf16.mxu0 0
      %1429 = vmatpush1.bf16.msra.mxu0 0
      %1430 = vmatprep.subr.bf16.mxu0 0
      %1431 = vmatpush1.bf16.msra.mxu0 0
      %1432 = vmatprep.subr.bf16.mxu0 0
      %1433 = vmatpush1.bf16.msra.mxu0 0
      %1434 = vmatprep.subr.bf16.mxu0 0
      %1435 = vmatpush1.bf16.msra.mxu0 0
      %1436 = vmatprep.subr.bf16.mxu0 0
      %1437 = vmatpush1.bf16.msra.mxu0 0
      %1438 = vmatprep.subr.bf16.mxu0 0
      %1439 = vmatpush1.bf16.msra.mxu0 0
      %1440 = vmatprep.subr.bf16.mxu0 0
      %1441 = vmatpush1.bf16.msra.mxu0 0
      %1442 = vmatprep.subr.bf16.mxu0 0
      %1443 = vmatpush1.bf16.msra.mxu0 0
      %1444 = vmatprep.subr.bf16.mxu0 0
      %1445 = vmatpush1.bf16.msra.mxu0 0
      %1446 = vmatprep.subr.bf16.mxu0 0
      %1447 = vmatpush1.bf16.msra.mxu0 0
      %1448 = vmatprep.subr.bf16.mxu0 0
      %1449 = vmatpush1.bf16.msra.mxu0 0
      %1450 = vmatprep.subr.bf16.mxu0 0
      %1451 = vmatpush1.bf16.msra.mxu0 0
      %1452 = vmatprep.subr.bf16.mxu0 0
      %1453 = vmatpush1.bf16.msra.mxu0 0
      %1454 = vmatprep.mubr.bf16.mxu0 0
      %1455 = vmatmul.mubr.bf16.gmra.mrb[0].mxu0 %v1417
      %v1456 = vpop.f32.mrb[0].mxu0
      %v1457 = vadd.f32 %v1389, %v1456
      %v1458 = vpop.f32.mrb[0].mxu0
      %v1459 = vpop.f32.mrb[0].mxu0
      %v1460 = vadd.f32 %v1394, %v1459
      %v1461 = vpop.f32.mrb[0].mxu0
      %1462 = vmatprep.mubr.bf16.mxu0 0
      %1463 = vmatmul.mubr.bf16.gmra.mrb[0].mxu0 %v1420
      %v1464 = vpop.f32.mrb[0].mxu0
      %v1465 = vadd.f32 %v1399, %v1464
      %v1466 = vpop.f32.mrb[0].mxu0
      %v1467 = vpop.f32.mrb[0].mxu0
      %v1468 = vadd.f32 %v1404, %v1467
      %v1469 = vpop.f32.mrb[0].mxu0
      %1470 = vdwg.mxu0
      %vm1471 = vcmp.ge.f32.partialorder %v1457, 0.0
      %vm1472 = vcmp.ge.f32.partialorder %v1460, 0.0
      %vm1473 = vcmp.ge.f32.partialorder %v1465, 0.0
      %vm1474 = vcmp.ge.f32.partialorder %v1468, 0.0
      %v1475 = vmul.f32 %v1457, 0.1
      %v1476 = vmul.f32 %v1460, 0.1
      %v1477 = vmul.f32 %v1465, 0.1
      %v1478 = vmul.f32 %v1468, 0.1
      %v1479 = vsel %vm1471, %v1457, %v1475
      %v1480 = vsel %vm1472, %v1460, %v1476
      %v1481 = vsel %vm1473, %v1465, %v1477
      %v1482 = vsel %vm1474, %v1468, %v1478
      %s1483 = scalar_lea.vmem %s3, 144
      %v1484 = vld [vmem:[%s1483] sm:$0xf]
      %v1485 = vld [vmem:[%s1483 + $0x4] sm:$0xf]
      %v1486 = vld [vmem:[%s1483 + $0x8] sm:$0xf]
      %v1487 = vld [vmem:[%s1483 + $0xc] sm:$0xf]
      %v1488 = vpack.c.bf16 %v1480, %v1479
      %v1489 = vpack.c.bf16 %v1482, %v1481
      %s1490 = scalar_lea.vmem %s4, 288
      %v1491 = vld [vmem:[%s1490] sm:$0xff]
      %v1492 = vld [vmem:[%s1490 + $0x8] sm:$0xff]
      %v1493 = vld [vmem:[%s1490 + $0x10] sm:$0xff]
      %v1494 = vld [vmem:[%s1490 + $0x18] sm:$0xff]
      %1496 = vset.pattern.permute.xlu0 0
      %1497 = vperm.xlu0 %1496, %v1491
      %v1498 = vpop.permute.xlu0 %1497
      %1501 = vset.pattern.permute.xlu0 0
      %1502 = vperm.xlu0 %1501, %v1492
      %v1503 = vpop.permute.xlu0 %1502
      %1506 = vset.pattern.permute.xlu0 0
      %1507 = vperm.xlu0 %1506, %v1493
      %v1508 = vpop.permute.xlu0 %1507
      %1511 = vset.pattern.permute.xlu0 0
      %1512 = vperm.xlu0 %1511, %v1494
      %v1513 = vpop.permute.xlu0 %1512
      %v1519 = vunpack.c.l.b16 %v1484
      %v1520 = vunpack.c.l.b16 %v1485
      %v1521 = vunpack.c.l.b16 %v1486
      %v1522 = vunpack.c.l.b16 %v1487
      %v1523 = vpack.c.b16 %v1520, %v1519
      %v1524 = vpack.c.b16 %v1522, %v1521
      %v1526 = vsel %vm575, %v1523, 0
      %v1529 = vsel %vm575, %v1524, 0
      %1531 = vmatprep.subr.bf16.mxu0 0
      %1532 = vmatpush1.bf16.msra.mxu0 %v1488
      %1533 = vmatprep.subr.bf16.mxu0 0
      %1534 = vmatpush1.bf16.msra.mxu0 %v1489
      %1535 = vmatprep.subr.bf16.mxu0 0
      %1536 = vmatpush1.bf16.msra.mxu0 0
      %1537 = vmatprep.subr.bf16.mxu0 0
      %1538 = vmatpush1.bf16.msra.mxu0 0
      %1539 = vmatprep.subr.bf16.mxu0 0
      %1540 = vmatpush1.bf16.msra.mxu0 0
      %1541 = vmatprep.subr.bf16.mxu0 0
      %1542 = vmatpush1.bf16.msra.mxu0 0
      %1543 = vmatprep.subr.bf16.mxu0 0
      %1544 = vmatpush1.bf16.msra.mxu0 0
      %1545 = vmatprep.subr.bf16.mxu0 0
      %1546 = vmatpush1.bf16.msra.mxu0 0
      %1547 = vmatprep.subr.bf16.mxu0 0
      %1548 = vmatpush1.bf16.msra.mxu0 0
      %1549 = vmatprep.subr.bf16.mxu0 0
      %1550 = vmatpush1.bf16.msra.mxu0 0
      %1551 = vmatprep.subr.bf16.mxu0 0
      %1552 = vmatpush1.bf16.msra.mxu0 0
      %1553 = vmatprep.subr.bf16.mxu0 0
      %1554 = vmatpush1.bf16.msra.mxu0 0
      %1555 = vmatprep.subr.bf16.mxu0 0
      %1556 = vmatpush1.bf16.msra.mxu0 0
      %1557 = vmatprep.subr.bf16.mxu0 0
      %1558 = vmatpush1.bf16.msra.mxu0 0
      %1559 = vmatprep.subr.bf16.mxu0 0
      %1560 = vmatpush1.bf16.msra.mxu0 0
      %1561 = vmatprep.subr.bf16.mxu0 0
      %1562 = vmatpush1.bf16.msra.mxu0 0
      %1563 = vmatprep.mubr.bf16.mxu0 0
      %1564 = vmatmul.mubr.bf16.gmra.mrb[0].mxu0 %v1526
      %v1565 = vpop.f32.mrb[0].mxu0
      %v1566 = vadd.f32 %v1498, %v1565
      %v1567 = vpop.f32.mrb[0].mxu0
      %v1568 = vpop.f32.mrb[0].mxu0
      %v1569 = vadd.f32 %v1503, %v1568
      %v1570 = vpop.f32.mrb[0].mxu0
      %1571 = vmatprep.mubr.bf16.mxu0 0
      %1572 = vmatmul.mubr.bf16.gmra.mrb[0].mxu0 %v1529
      %v1573 = vpop.f32.mrb[0].mxu0
      %v1574 = vadd.f32 %v1508, %v1573
      %v1575 = vpop.f32.mrb[0].mxu0
      %v1576 = vpop.f32.mrb[0].mxu0
      %v1577 = vadd.f32 %v1513, %v1576
      %v1578 = vpop.f32.mrb[0].mxu0
      %1579 = vdwg.mxu0
      %v1580 = vadd.f32 %v1370, %v1566
      %v1581 = vadd.f32 %v1371, %v1569
      %v1582 = vadd.f32 %v1372, %v1574
      %v1583 = vadd.f32 %v1373, %v1577
      %v1584 = vpack.c.bf16 %v1581, %v1580
      %v1585 = vpack.c.bf16 %v1583, %v1582
      %v1586 = vld [vmem:[%s5] sm:$0xf]
      %v1587 = vld [vmem:[%s5 + $0x4] sm:$0xf]
      %v1588 = vld [vmem:[%s5 + $0x8] sm:$0xf]
      %v1589 = vld [vmem:[%s5 + $0xc] sm:$0xf]
      %v1590 = vld [vmem:[%s5 + $0x10] sm:$0xf]
      %v1591 = vld [vmem:[%s5 + $0x14] sm:$0xf]
      %v1592 = vld [vmem:[%s5 + $0x18] sm:$0xf]
      %v1593 = vld [vmem:[%s5 + $0x1c] sm:$0xf]
      %v1594 = vld [vmem:[%s5 + $0x20] sm:$0xf]
      %v1595 = vld [vmem:[%s5 + $0x24] sm:$0xf]
      %v1596 = vld [vmem:[%s5 + $0x28] sm:$0xf]
      %v1597 = vld [vmem:[%s5 + $0x2c] sm:$0xf]
      %v1598 = vld [vmem:[%s5 + $0x30] sm:$0xf]
      %v1599 = vld [vmem:[%s5 + $0x34] sm:$0xf]
      %v1600 = vld [vmem:[%s5 + $0x38] sm:$0xf]
      %v1601 = vld [vmem:[%s5 + $0x3c] sm:$0xf]
      %v1602 = vld [vmem:[%s5 + $0x40] sm:$0xf]
      %v1603 = vld [vmem:[%s5 + $0x44] sm:$0xf]
      %v1604 = vld [vmem:[%s6] sm:$0xff]
      %v1605 = vld [vmem:[%s6 + $0x8] sm:$0xff]
      %v1606 = vld [vmem:[%s6 + $0x10] sm:$0xff]
      %v1607 = vld [vmem:[%s6 + $0x18] sm:$0xff]
      %v1608 = vld [vmem:[%s6 + $0x20] sm:$0xff]
      %v1609 = vld [vmem:[%s6 + $0x28] sm:$0xff]
      %v1610 = vld [vmem:[%s6 + $0x30] sm:$0xff]
      %v1611 = vld [vmem:[%s6 + $0x38] sm:$0xff]
      %v1612 = vld [vmem:[%s6 + $0x40] sm:$0xff]
      %v1613 = vld [vmem:[%s6 + $0x48] sm:$0xff]
      %v1614 = vld [vmem:[%s6 + $0x50] sm:$0xff]
      %v1615 = vld [vmem:[%s6 + $0x58] sm:$0xff]
      %v1616 = vld [vmem:[%s6 + $0x60] sm:$0xff]
      %v1617 = vld [vmem:[%s6 + $0x68] sm:$0xff]
      %v1618 = vld [vmem:[%s6 + $0x70] sm:$0xff]
      %v1619 = vld [vmem:[%s6 + $0x78] sm:$0xff]
      %v1620 = vld [vmem:[%s6 + $0x80] sm:$0xff]
      %v1621 = vld [vmem:[%s6 + $0x88] sm:$0xff]
      %1623 = vset.pattern.permute.xlu0 0
      %1624 = vperm.xlu0 %1623, %v1604
      %v1625 = vpop.permute.xlu0 %1624
      %1628 = vset.pattern.permute.xlu0 0
      %1629 = vperm.xlu0 %1628, %v1605
      %v1630 = vpop.permute.xlu0 %1629
      %1633 = vset.pattern.permute.xlu0 0
      %1634 = vperm.xlu0 %1633, %v1606
      %v1635 = vpop.permute.xlu0 %1634
      %1638 = vset.pattern.permute.xlu0 0
      %1639 = vperm.xlu0 %1638, %v1607
      %v1640 = vpop.permute.xlu0 %1639
      %1643 = vset.pattern.permute.xlu0 0
      %1644 = vperm.xlu0 %1643, %v1608
      %v1645 = vpop.permute.xlu0 %1644
      %1648 = vset.pattern.permute.xlu0 0
      %1649 = vperm.xlu0 %1648, %v1609
      %v1650 = vpop.permute.xlu0 %1649
      %1653 = vset.pattern.permute.xlu0 0
      %1654 = vperm.xlu0 %1653, %v1610
      %v1655 = vpop.permute.xlu0 %1654
      %1658 = vset.pattern.permute.xlu0 0
      %1659 = vperm.xlu0 %1658, %v1611
      %v1660 = vpop.permute.xlu0 %1659
      %1663 = vset.pattern.permute.xlu0 0
      %1664 = vperm.xlu0 %1663, %v1612
      %v1665 = vpop.permute.xlu0 %1664
      %1668 = vset.pattern.permute.xlu0 0
      %1669 = vperm.xlu0 %1668, %v1613
      %v1670 = vpop.permute.xlu0 %1669
      %1673 = vset.pattern.permute.xlu0 0
      %1674 = vperm.xlu0 %1673, %v1614
      %v1675 = vpop.permute.xlu0 %1674
      %1678 = vset.pattern.permute.xlu0 0
      %1679 = vperm.xlu0 %1678, %v1615
      %v1680 = vpop.permute.xlu0 %1679
      %1683 = vset.pattern.permute.xlu0 0
      %1684 = vperm.xlu0 %1683, %v1616
      %v1685 = vpop.permute.xlu0 %1684
      %1688 = vset.pattern.permute.xlu0 0
      %1689 = vperm.xlu0 %1688, %v1617
      %v1690 = vpop.permute.xlu0 %1689
      %1693 = vset.pattern.permute.xlu0 0
      %1694 = vperm.xlu0 %1693, %v1618
      %v1695 = vpop.permute.xlu0 %1694
      %1698 = vset.pattern.permute.xlu0 0
      %1699 = vperm.xlu0 %1698, %v1619
      %v1700 = vpop.permute.xlu0 %1699
      %1703 = vset.pattern.permute.xlu0 0
      %1704 = vperm.xlu0 %1703, %v1620
      %v1705 = vpop.permute.xlu0 %1704
      %1708 = vset.pattern.permute.xlu0 0
      %1709 = vperm.xlu0 %1708, %v1621
      %v1710 = vpop.permute.xlu0 %1709
      %v1730 = vunpack.c.l.b16 %v1586
      %v1731 = vunpack.c.l.b16 %v1587
      %v1732 = vunpack.c.l.b16 %v1588
      %v1733 = vunpack.c.l.b16 %v1589
      %v1734 = vunpack.c.l.b16 %v1590
      %v1735 = vunpack.c.l.b16 %v1591
      %v1736 = vunpack.c.l.b16 %v1592
      %v1737 = vunpack.c.l.b16 %v1593
      %v1738 = vunpack.c.l.b16 %v1594
      %v1739 = vunpack.c.l.b16 %v1595
      %v1740 = vunpack.c.l.b16 %v1596
      %v1741 = vunpack.c.l.b16 %v1597
      %v1742 = vunpack.c.l.b16 %v1598
      %v1743 = vunpack.c.l.b16 %v1599
      %v1744 = vunpack.c.l.b16 %v1600
      %v1745 = vunpack.c.l.b16 %v1601
      %v1746 = vunpack.c.l.b16 %v1602
      %v1747 = vunpack.c.l.b16 %v1603
      %v1748 = vpack.c.b16 %v1731, %v1730
      %v1749 = vpack.c.b16 %v1733, %v1732
      %v1750 = vpack.c.b16 %v1735, %v1734
      %v1751 = vpack.c.b16 %v1737, %v1736
      %v1752 = vpack.c.b16 %v1739, %v1738
      %v1753 = vpack.c.b16 %v1741, %v1740
      %v1754 = vpack.c.b16 %v1743, %v1742
      %v1755 = vpack.c.b16 %v1745, %v1744
      %v1756 = vpack.c.b16 %v1747, %v1746
      %v1758 = vsel %vm575, %v1748, 0
      %v1761 = vsel %vm575, %v1749, 0
      %v1764 = vsel %vm575, %v1750, 0
      %v1767 = vsel %vm575, %v1751, 0
      %v1770 = vsel %vm575, %v1752, 0
      %v1773 = vsel %vm575, %v1753, 0
      %v1776 = vsel %vm575, %v1754, 0
      %v1779 = vsel %vm575, %v1755, 0
      %v1782 = vsel %vm575, %v1756, 0
      %1784 = vmatprep.subr.bf16.mxu0 0
      %1785 = vmatpush1.bf16.msra.mxu0 %v1584
      %1786 = vmatprep.subr.bf16.mxu0 0
      %1787 = vmatpush1.bf16.msra.mxu0 %v1585
      %1788 = vmatprep.subr.bf16.mxu0 0
      %1789 = vmatpush1.bf16.msra.mxu0 0
      %1790 = vmatprep.subr.bf16.mxu0 0
      %1791 = vmatpush1.bf16.msra.mxu0 0
      %1792 = vmatprep.subr.bf16.mxu0 0
      %1793 = vmatpush1.bf16.msra.mxu0 0
      %1794 = vmatprep.subr.bf16.mxu0 0
      %1795 = vmatpush1.bf16.msra.mxu0 0
      %1796 = vmatprep.subr.bf16.mxu0 0
      %1797 = vmatpush1.bf16.msra.mxu0 0
      %1798 = vmatprep.subr.bf16.mxu0 0
      %1799 = vmatpush1.bf16.msra.mxu0 0
      %1800 = vmatprep.subr.bf16.mxu0 0
      %1801 = vmatpush1.bf16.msra.mxu0 0
      %1802 = vmatprep.subr.bf16.mxu0 0
      %1803 = vmatpush1.bf16.msra.mxu0 0
      %1804 = vmatprep.subr.bf16.mxu0 0
      %1805 = vmatpush1.bf16.msra.mxu0 0
      %1806 = vmatprep.subr.bf16.mxu0 0
      %1807 = vmatpush1.bf16.msra.mxu0 0
      %1808 = vmatprep.subr.bf16.mxu0 0
      %1809 = vmatpush1.bf16.msra.mxu0 0
      %1810 = vmatprep.subr.bf16.mxu0 0
      %1811 = vmatpush1.bf16.msra.mxu0 0
      %1812 = vmatprep.subr.bf16.mxu0 0
      %1813 = vmatpush1.bf16.msra.mxu0 0
      %1814 = vmatprep.subr.bf16.mxu0 0
      %1815 = vmatpush1.bf16.msra.mxu0 0
      %1816 = vmatprep.mubr.bf16.mxu0 0
      %1817 = vmatmul.mubr.bf16.gmra.mrb[0].mxu0 %v1758
      %v1818 = vpop.f32.mrb[0].mxu0
      %v1819 = vadd.f32 %v1625, %v1818
      %v1820 = vpop.f32.mrb[0].mxu0
      %v1821 = vpop.f32.mrb[0].mxu0
      %v1822 = vadd.f32 %v1630, %v1821
      %v1823 = vpop.f32.mrb[0].mxu0
      %1824 = vmatprep.mubr.bf16.mxu0 0
      %1825 = vmatmul.mubr.bf16.gmra.mrb[0].mxu0 %v1761
      %v1826 = vpop.f32.mrb[0].mxu0
      %v1827 = vadd.f32 %v1635, %v1826
      %v1828 = vpop.f32.mrb[0].mxu0
      %v1829 = vpop.f32.mrb[0].mxu0
      %v1830 = vadd.f32 %v1640, %v1829
      %v1831 = vpop.f32.mrb[0].mxu0
      %1832 = vmatprep.mubr.bf16.mxu0 0
      %1833 = vmatmul.mubr.bf16.gmra.mrb[0].mxu0 %v1764
      %v1834 = vpop.f32.mrb[0].mxu0
      %v1835 = vadd.f32 %v1645, %v1834
      %v1836 = vpop.f32.mrb[0].mxu0
      %v1837 = vpop.f32.mrb[0].mxu0
      %v1838 = vadd.f32 %v1650, %v1837
      %v1839 = vpop.f32.mrb[0].mxu0
      %1840 = vmatprep.mubr.bf16.mxu0 0
      %1841 = vmatmul.mubr.bf16.gmra.mrb[0].mxu0 %v1767
      %v1842 = vpop.f32.mrb[0].mxu0
      %v1843 = vadd.f32 %v1655, %v1842
      %v1844 = vpop.f32.mrb[0].mxu0
      %v1845 = vpop.f32.mrb[0].mxu0
      %v1846 = vadd.f32 %v1660, %v1845
      %v1847 = vpop.f32.mrb[0].mxu0
      %1848 = vmatprep.mubr.bf16.mxu0 0
      %1849 = vmatmul.mubr.bf16.gmra.mrb[0].mxu0 %v1770
      %v1850 = vpop.f32.mrb[0].mxu0
      %v1851 = vadd.f32 %v1665, %v1850
      %v1852 = vpop.f32.mrb[0].mxu0
      %v1853 = vpop.f32.mrb[0].mxu0
      %v1854 = vadd.f32 %v1670, %v1853
      %v1855 = vpop.f32.mrb[0].mxu0
      %1856 = vmatprep.mubr.bf16.mxu0 0
      %1857 = vmatmul.mubr.bf16.gmra.mrb[0].mxu0 %v1773
      %v1858 = vpop.f32.mrb[0].mxu0
      %v1859 = vadd.f32 %v1675, %v1858
      %v1860 = vpop.f32.mrb[0].mxu0
      %v1861 = vpop.f32.mrb[0].mxu0
      %v1862 = vadd.f32 %v1680, %v1861
      %v1863 = vpop.f32.mrb[0].mxu0
      %1864 = vmatprep.mubr.bf16.mxu0 0
      %1865 = vmatmul.mubr.bf16.gmra.mrb[0].mxu0 %v1776
      %v1866 = vpop.f32.mrb[0].mxu0
      %v1867 = vadd.f32 %v1685, %v1866
      %v1868 = vpop.f32.mrb[0].mxu0
      %v1869 = vpop.f32.mrb[0].mxu0
      %v1870 = vadd.f32 %v1690, %v1869
      %v1871 = vpop.f32.mrb[0].mxu0
      %1872 = vmatprep.mubr.bf16.mxu0 0
      %1873 = vmatmul.mubr.bf16.gmra.mrb[0].mxu0 %v1779
      %v1874 = vpop.f32.mrb[0].mxu0
      %v1875 = vadd.f32 %v1695, %v1874
      %v1876 = vpop.f32.mrb[0].mxu0
      %v1877 = vpop.f32.mrb[0].mxu0
      %v1878 = vadd.f32 %v1700, %v1877
      %v1879 = vpop.f32.mrb[0].mxu0
      %1880 = vmatprep.mubr.bf16.mxu0 0
      %1881 = vmatmul.mubr.bf16.gmra.mrb[0].mxu0 %v1782
      %v1882 = vpop.f32.mrb[0].mxu0
      %v1883 = vadd.f32 %v1705, %v1882
      %v1884 = vpop.f32.mrb[0].mxu0
      %v1885 = vpop.f32.mrb[0].mxu0
      %v1886 = vadd.f32 %v1710, %v1885
      %v1887 = vpop.f32.mrb[0].mxu0
      %1888 = vdwg.mxu0
      %v1889 = vpack.c.bf16 %v1822, %v1819
      %v1890 = vpack.c.bf16 %v1830, %v1827
      %v1891 = vpack.c.bf16 %v1838, %v1835
      %v1892 = vpack.c.bf16 %v1846, %v1843
      %v1893 = vpack.c.bf16 %v1854, %v1851
      %v1894 = vpack.c.bf16 %v1862, %v1859
      %v1895 = vpack.c.bf16 %v1870, %v1867
      %v1896 = vpack.c.bf16 %v1878, %v1875
      %v1897 = vpack.c.bf16 %v1886, %v1883
      %v1907 = vunpack.c.l.b16 %v1889
      %v1908 = vunpack.c.h.b16 %v1889
      %v1909 = vunpack.c.l.b16 %v1890
      %v1910 = vunpack.c.h.b16 %v1890
      %v1911 = vunpack.c.l.b16 %v1891
      %v1912 = vunpack.c.h.b16 %v1891
      %v1913 = vunpack.c.l.b16 %v1892
      %v1914 = vunpack.c.h.b16 %v1892
      %v1915 = vunpack.c.l.b16 %v1893
      %v1916 = vunpack.c.h.b16 %v1893
      %v1917 = vunpack.c.l.b16 %v1894
      %v1918 = vunpack.c.h.b16 %v1894
      %v1919 = vunpack.c.l.b16 %v1895
      %v1920 = vunpack.c.h.b16 %v1895
      %v1921 = vunpack.c.l.b16 %v1896
      %v1922 = vunpack.c.h.b16 %v1896
      %v1923 = vunpack.c.l.b16 %v1897
      %v1924 = vunpack.c.h.b16 %v1897
      %v1925 = vpack.c.b16 %v1907, %v1907
      %v1926 = vpack.c.b16 %v1908, %v1908
      %v1927 = vpack.c.b16 %v1909, %v1909
      %v1928 = vpack.c.b16 %v1910, %v1910
      %v1929 = vpack.c.b16 %v1911, %v1911
      %v1930 = vpack.c.b16 %v1912, %v1912
      %v1931 = vpack.c.b16 %v1913, %v1913
      %v1932 = vpack.c.b16 %v1914, %v1914
      %v1933 = vpack.c.b16 %v1915, %v1915
      %v1934 = vpack.c.b16 %v1916, %v1916
      %v1935 = vpack.c.b16 %v1917, %v1917
      %v1936 = vpack.c.b16 %v1918, %v1918
      %v1937 = vpack.c.b16 %v1919, %v1919
      %v1938 = vpack.c.b16 %v1920, %v1920
      %v1939 = vpack.c.b16 %v1921, %v1921
      %v1940 = vpack.c.b16 %v1922, %v1922
      %v1941 = vpack.c.b16 %v1923, %v1923
      %v1942 = vpack.c.b16 %v1924, %v1924
      %1961 = vst [vmem:[%s403] sm:$0xf] %v1925
      %1962 = vst [vmem:[%s403 + $0x4] sm:$0xf] %v1926
      %1963 = vst [vmem:[%s403 + $0x8] sm:$0xf] %v1927
      %1964 = vst [vmem:[%s403 + $0xc] sm:$0xf] %v1928
      %1965 = vst [vmem:[%s403 + $0x10] sm:$0xf] %v1929
      %1966 = vst [vmem:[%s403 + $0x14] sm:$0xf] %v1930
      %1967 = vst [vmem:[%s403 + $0x18] sm:$0xf] %v1931
      %1968 = vst [vmem:[%s403 + $0x1c] sm:$0xf] %v1932
      %1969 = vst [vmem:[%s403 + $0x20] sm:$0xf] %v1933
      %1970 = vst [vmem:[%s403 + $0x24] sm:$0xf] %v1934
      %1971 = vst [vmem:[%s403 + $0x28] sm:$0xf] %v1935
      %1972 = vst [vmem:[%s403 + $0x2c] sm:$0xf] %v1936
      %1973 = vst [vmem:[%s403 + $0x30] sm:$0xf] %v1937
      %1974 = vst [vmem:[%s403 + $0x34] sm:$0xf] %v1938
      %1975 = vst [vmem:[%s403 + $0x38] sm:$0xf] %v1939
      %1976 = vst [vmem:[%s403 + $0x3c] sm:$0xf] %v1940
      %1977 = vst [vmem:[%s403 + $0x40] sm:$0xf] %v1941
      %1978 = vst [vmem:[%s403 + $0x44] sm:$0xf] %v1942
      %v1979 = vld [vmem:[%s7] sm:$0xf]
      %v1980 = vld [vmem:[%s7 + $0x4] sm:$0x3]
      %v1981 = vld [vmem:[%s8] sm:$0xff]
      %v1982 = vld [vmem:[%s8 + $0x8] sm:$0xf]
      %1984 = vset.pattern.permute.xlu0 0
      %1985 = vperm.xlu0 %1984, %v1981
      %v1986 = vpop.permute.xlu0 %1985
      %1989 = vset.pattern.permute.xlu0 0
      %1990 = vperm.xlu0 %1989, %v1982
      %v1991 = vpop.permute.xlu0 %1990
      %v1995 = vunpack.c.l.b16 %v1979
      %v1996 = vunpack.c.l.b16 %v1980
      %v1997 = vpack.c.b16 %v1996, %v1995
      %v1999 = vsel %vm575, %v1997, 0
      %2001 = vmatprep.subr.bf16.mxu0 0
      %2002 = vmatpush1.bf16.msra.mxu0 %v1584
      %2003 = vmatprep.subr.bf16.mxu0 0
      %2004 = vmatpush1.bf16.msra.mxu0 %v1585
      %2005 = vmatprep.subr.bf16.mxu0 0
      %2006 = vmatpush1.bf16.msra.mxu0 0
      %2007 = vmatprep.subr.bf16.mxu0 0
      %2008 = vmatpush1.bf16.msra.mxu0 0
      %2009 = vmatprep.subr.bf16.mxu0 0
      %2010 = vmatpush1.bf16.msra.mxu0 0
      %2011 = vmatprep.subr.bf16.mxu0 0
      %2012 = vmatpush1.bf16.msra.mxu0 0
      %2013 = vmatprep.subr.bf16.mxu0 0
      %2014 = vmatpush1.bf16.msra.mxu0 0
      %2015 = vmatprep.subr.bf16.mxu0 0
      %2016 = vmatpush1.bf16.msra.mxu0 0
      %2017 = vmatprep.subr.bf16.mxu0 0
      %2018 = vmatpush1.bf16.msra.mxu0 0
      %2019 = vmatprep.subr.bf16.mxu0 0
      %2020 = vmatpush1.bf16.msra.mxu0 0
      %2021 = vmatprep.subr.bf16.mxu0 0
      %2022 = vmatpush1.bf16.msra.mxu0 0
      %2023 = vmatprep.subr.bf16.mxu0 0
      %2024 = vmatpush1.bf16.msra.mxu0 0
      %2025 = vmatprep.subr.bf16.mxu0 0
      %2026 = vmatpush1.bf16.msra.mxu0 0
      %2027 = vmatprep.subr.bf16.mxu0 0
      %2028 = vmatpush1.bf16.msra.mxu0 0
      %2029 = vmatprep.subr.bf16.mxu0 0
      %2030 = vmatpush1.bf16.msra.mxu0 0
      %2031 = vmatprep.subr.bf16.mxu0 0
      %2032 = vmatpush1.bf16.msra.mxu0 0
      %2033 = vmatprep.mubr.bf16.mxu0 0
      %2034 = vmatmul.mubr.bf16.gmra.mrb[0].mxu0 %v1999
      %v2035 = vpop.f32.mrb[0].mxu0
      %v2036 = vadd.f32 %v1986, %v2035
      %v2037 = vpop.f32.mrb[0].mxu0
      %v2038 = vpop.f32.mrb[0].mxu0
      %v2039 = vadd.f32 %v1991, %v2038
      %v2040 = vpop.f32.mrb[0].mxu0
      %2041 = vdwg.mxu0
      %v2042 = vpack.c.bf16 %v2039, %v2036
      %v2044 = vunpack.c.l.b16 %v2042
      %v2045 = vunpack.c.h.b16 %v2042
      %v2046 = vpack.c.b16 %v2044, %v2044
      %v2047 = vpack.c.b16 %v2045, %v2045
      %2050 = vst [vmem:[%s411] sm:$0xf] %v2046
      %2051 = vst [vmem:[%s411 + $0x4] sm:$0x3] %v2047
      %p2052 = scmp.lt.s32.totalorder %s26, 1
      %s2053 = scalar_select %p2052, %s26, 1
      %p2054 = scmp.lt.s32.totalorder %s27, 0
      %s2055 = scalar_select %p2054, %s27, 0
      %s2056 = smul.addr %s2053, 18
      %s2057 = sadd.s32 %s2055, %s2056
      %s2058 = smul.addr %s2057, 4
      %s2059 = scalar_lea.vmem %s9, %s2058
      %p2060 = scmp.lt.s32.totalorder %s26, 1
      %s2061 = scalar_select %p2060, %s26, 1
      %p2062 = scmp.lt.s32.totalorder %s27, 0
      %s2063 = scalar_select %p2062, %s27, 0
      %s2064 = smul.addr %s2061, 2
      %s2065 = sadd.s32 %s2063, %s2064
      %s2066 = smul.addr %s2065, 4
      %s2067 = scalar_lea.vmem %s10, %s2066
      // Predicated region
      $region57: #{kernel_predictor_forward.1} parent=55 // pred_check
        %p2068 = pneg %p250
      $region58: #{kernel_predictor_forward.1} parent=55 // pred_check_branch
        %2070 = sbr.rel (%p2068) target = $region60
      $region59: #{kernel_predictor_forward.1} parent=55 // pred_region
        _
      $region60: #{kernel_predictor_forward.1} parent=55 // pred_fallthru
        _
      // Predicated region
      $region61: #{kernel_predictor_forward.1} parent=55 // pred_check
        %p2071 = pneg %p278
      $region62: #{kernel_predictor_forward.1} parent=55 // pred_check_branch
        %2073 = sbr.rel (%p2071) target = $region64
      $region63: #{kernel_predictor_forward.1} parent=55 // pred_region
        _
      $region64: #{kernel_predictor_forward.1} parent=55 // pred_fallthru
        _
    $region56: #{kernel_predictor_forward.1} parent=5 // pred_fallthru
      _
    %p2074 = scmp.le.s32.totalorder 2, %s17
    // Predicated region
    $region65: #{kernel_predictor_forward.1} parent=5 // pred_check
      %p2075 = pneg %p2074
    $region66: #{kernel_predictor_forward.1} parent=5 // pred_check_branch
      %2077 = sbr.rel (%p2075) target = $region68
    $region67: #{kernel_predictor_forward.1} parent=5 // pred_region
      %s2078 = ssub.s32 %s17, 2
      // Predicated region
      $region69: #{kernel_predictor_forward.1} parent=67 // pred_check
        %p2079 = pneg %p256
      $region70: #{kernel_predictor_forward.1} parent=67 // pred_check_branch
        %2081 = sbr.rel (%p2079) target = $region72
      $region71: #{kernel_predictor_forward.1} parent=67 // pred_region
        %p2082 = scmp.lt.s32.totalorder %s28, 1
        %s2083 = scalar_select %p2082, %s28, 1
        %p2084 = scmp.lt.s32.totalorder %s29, 0
        %s2085 = scalar_select %p2084, %s29, 0
        %s2086 = smul.addr %s2083, 18
        %s2087 = sadd.s32 %s2085, %s2086
        %s2088 = smul.addr %s2087, 4
        %s2089 = scalar_lea.vmem %s9, %s2088
      $region72: #{kernel_predictor_forward.1} parent=67 // pred_fallthru
        _
      // Predicated region
      $region73: #{kernel_predictor_forward.1} parent=67 // pred_check
        %p2090 = pneg %p284
      $region74: #{kernel_predictor_forward.1} parent=67 // pred_check_branch
        %2092 = sbr.rel (%p2090) target = $region76
      $region75: #{kernel_predictor_forward.1} parent=67 // pred_region
        %p2093 = scmp.lt.s32.totalorder %s28, 1
        %s2094 = scalar_select %p2093, %s28, 1
        %p2095 = scmp.lt.s32.totalorder %s29, 0
        %s2096 = scalar_select %p2095, %s29, 0
        %s2097 = smul.addr %s2094, 2
        %s2098 = sadd.s32 %s2096, %s2097
        %s2099 = smul.addr %s2098, 4
        %s2100 = scalar_lea.vmem %s10, %s2099
      $region76: #{kernel_predictor_forward.1} parent=67 // pred_fallthru
        _
    $region68: #{kernel_predictor_forward.1} parent=5 // pred_fallthru
      _
  $region6: #{kernel_predictor_forward.1} parent=0 // loop_footer
    %s21 = sadd.s32 1, %s17
  $region7: #{kernel_predictor_forward.1} parent=0 // loop_footer_branch
    %16 = sbr.rel target = $region3
  $region8: #{kernel_predictor_forward.1} parent=0 // loop_exit
    _

</llo_original>
